<compile_context>
chip_gen: v6e
topology: v6e:2x2x1
jax: 0.10.0
libtpu: 0.0.40
codegen_flags: <defaults>
</compile_context>

<pallas_src>
import functools

import jax
import jax.numpy as jnp
from jax import lax
from jax.experimental import pallas as pl
from jax.experimental.pallas import tpu as pltpu

EPS = 1e-5  # InstanceNorm2d default eps


def _conv3x3_instnorm(a, w_ref, masks, H, W):
    """ReflectionPad2d(1) -> Conv2d(C,C,3,1,0) (no bias) -> InstanceNorm2d.

    a:     (C_in, H*W) f32, row-major flattening of (C_in, H, W).
    w_ref: Ref of shape (3, C_out, 3*C_in) bf16; index 0 is kh, columns are
           (kw, c_in) with c_in fastest.
    Returns (C_out, H*W) f32.
    """
    first_row, last_row, first_col, last_col = masks
    HW = H * W

    # Row-shifted images (reflection in h) via XLU rolls + boundary selects.
    prev_row = pltpu.roll(a, shift=W, axis=1)        # [p] = a[p - W]  (row h-1)
    next_row = pltpu.roll(a, shift=HW - W, axis=1)   # [p] = a[p + W]  (row h+1)
    up = jnp.where(first_row, next_row, prev_row)    # kh = 0 (dh = -1), reflect at h == 0
    down = jnp.where(last_row, prev_row, next_row)   # kh = 2 (dh = +1), reflect at h == H-1

    acc = None
    for g, t in enumerate((up, a, down)):            # kh = 0, 1, 2
        # Column-shifted images (reflection in w) for this kernel row.
        prev_col = pltpu.roll(t, shift=1, axis=1)        # [p] = t[p - 1]
        next_col = pltpu.roll(t, shift=HW - 1, axis=1)   # [p] = t[p + 1]
        left = jnp.where(first_col, next_col, prev_col)   # kw = 0 (dw = -1)
        right = jnp.where(last_col, prev_col, next_col)   # kw = 2 (dw = +1)

        patch = jnp.concatenate(
            [left.astype(jnp.bfloat16),
             t.astype(jnp.bfloat16),
             right.astype(jnp.bfloat16)], axis=0)         # (3*C_in, HW) bf16

        # bf16 x bf16 MXU matmul, f32 accumulation.
        part = jnp.dot(w_ref[g], patch, preferred_element_type=jnp.float32)
        acc = part if acc is None else acc + part          # (C_out, HW) f32

    # Two-pass InstanceNorm (centered variance avoids cancellation).
    inv_hw = jnp.float32(1.0 / HW)
    mean = jnp.sum(acc, axis=1, keepdims=True) * inv_hw
    yc = acc - mean
    var = jnp.sum(yc * yc, axis=1, keepdims=True) * inv_hw
    return yc * lax.rsqrt(var + EPS)


def _resnet_block_kernel(x_ref, w1_ref, w2_ref, o_ref, *, C, H, W):
    HW = H * W
    x = x_ref[...].astype(jnp.float32)                  # (C, HW), lane-dense

    # Boundary masks at (1, HW): broadcast inside jnp.where (tiny vreg cost).
    pos = lax.broadcasted_iota(jnp.int32, (1, HW), 1)
    wpos = pos % W
    masks = (pos < W,                 # first_row
             pos >= (H - 1) * W,      # last_row
             wpos == 0,               # first_col
             wpos == W - 1)           # last_col

    y = _conv3x3_instnorm(x, w1_ref, masks, H, W)        # i = 0: Identity
    y = _conv3x3_instnorm(y, w2_ref, masks, H, W)        # i = 1
    y = jnp.maximum(y, 0.0)                              # ReLU

    o_ref[...] = (x + y).astype(o_ref.dtype)             # residual, lane-dense store


def _pack(w, C):
    """(C_out, C_in, 3, 3) -> (3[kh], C_out, 3[kw]*C_in) bf16; column order
    (kw, c_in) matches the per-kh patch concatenation in the kernel."""
    wm = jnp.transpose(w, (2, 0, 3, 1))                  # (kh, C_out, kw, C_in)
    return wm.reshape(3, C, 3 * C).astype(jnp.bfloat16)


def resnet_block(x, w1, b1, w2, b2):
    """x: (N, C, H, W); w*: (C, C, 3, 3); b*: (C,).  Returns (N, C, H, W)."""
    # Conv biases are kept for API parity but are mathematically dead: a
    # per-channel constant added before an affine-free InstanceNorm is exactly
    # cancelled by the mean subtraction.
    del b1, b2
    N, C, H, W = x.shape
    HW = H * W

    w1p, w2p = _pack(w1, C), _pack(w2, C)
    x_flat = x.reshape(N, C, HW)      # lane-dense layout plumbing, outside the kernel
    kernel = functools.partial(_resnet_block_kernel, C=C, H=H, W=W)

    cost = pl.CostEstimate(
        flops=2 * 2 * C * 9 * C * HW * N,                 # two 3x3 convs
        transcendentals=2 * N * C,                        # rsqrt per channel per IN
        bytes_accessed=2 * N * C * HW * x.dtype.itemsize + 2 * (w1p.size + w2p.size),
    )
    try:
        vmem_cap = pltpu.get_tpu_info().vmem_capacity_bytes
    except Exception:
        vmem_cap = 64 * 1024 * 1024                       # safe on every generation
    params = pltpu.CompilerParams(
        dimension_semantics=("parallel",),                # megacore over batch
        vmem_limit_bytes=int(vmem_cap * 7 // 8),          # ~112 MiB v5e/v6e, ~56 MiB v7x
    )

    # NOTE: at real CycleGAN shapes (C=128-256, H=W=64) a single fused kernel
    # must keep the full (C, HW) activations resident (InstanceNorm reduces
    # over all of HW and the second conv consumes all channels).  To tile H
    # (1-row halo) or C_out -- and to expose a second "parallel" grid axis so
    # both v7x TensorCores stay busy at N=1 -- split the two conv+IN
    # sub-blocks into two pallas_call passes.

    def call(weight_pipeline):
        wkw = {} if weight_pipeline is None else dict(pipeline_mode=weight_pipeline)
        return pl.pallas_call(
            kernel,
            out_shape=jax.ShapeDtypeStruct((N, C, HW), x.dtype),
            grid=(N,),
            in_specs=[
                pl.BlockSpec((None, C, HW), lambda n: (n, 0, 0)),      # one sample / step
                pl.BlockSpec((3, C, 3 * C), lambda n: (0, 0, 0), **wkw),  # conv1 w (bf16)
                pl.BlockSpec((3, C, 3 * C), lambda n: (0, 0, 0), **wkw),  # conv2 w (bf16)
            ],
            out_specs=pl.BlockSpec((None, C, HW), lambda n: (n, 0, 0)),
            compiler_params=params,
            cost_estimate=cost,
        )(x_flat, w1p, w2p)

    try:
        # Grid-invariant weights: single buffer (no double-buffering).
        out = jax.block_until_ready(call(pl.Buffered(1)))
    except Exception:
        out = call(None)
    return out.reshape(N, C, H, W)


def _reference(x, w1, b1, w2, b2, *, bf16_matmul=False):
    """Pure-JAX reference.  bf16_matmul=True emulates the kernel's bf16 MXU
    operands (rounding only; accumulation stays f32)."""
    def sub_block(inp, w, b):
        xp = jnp.pad(inp, ((0, 0), (0, 0), (1, 1), (1, 1)), mode="reflect")
        if bf16_matmul:
            xp = xp.astype(jnp.bfloat16).astype(jnp.float32)
            w = w.astype(jnp.bfloat16).astype(jnp.float32)
        y = lax.conv_general_dilated(
            xp, w, (1, 1), "VALID",
            dimension_numbers=("NCHW", "OIHW", "NCHW"),
            precision=lax.Precision.HIGHEST) + b.reshape(1, -1, 1, 1)
        m = y.mean(axis=(2, 3), keepdims=True)
        v = ((y - m) ** 2).mean(axis=(2, 3), keepdims=True)
        return (y - m) / jnp.sqrt(v + EPS)

    y = sub_block(x, w1, b1)
    y = sub_block(y, w2, b2)
    return x + jnp.maximum(y, 0.0)


if __name__ == "__main__":
    N, C, H, W = 2, 4, 16, 16
    key = jax.random.PRNGKey(0)
    kx, kw1, kb1, kw2, kb2 = jax.random.split(key, 5)

    x = jax.random.normal(kx, (N, C, H, W), jnp.float32)
    w1 = jax.random.normal(kw1, (C, C, 3, 3), jnp.float32) * 0.2
    b1 = jax.random.normal(kb1, (C,), jnp.float32) * 0.1
    w2 = jax.random.normal(kw2, (C, C, 3, 3), jnp.float32) * 0.2
    b2 = jax.random.normal(kb2, (C,), jnp.float32) * 0.1

    out = jax.block_until_ready(resnet_block(x, w1, b1, w2, b2))
    assert out.shape == (N, C, H, W)

    # Tight check vs a reference that emulates the kernel's bf16 MXU rounding.
    ref_bf16 = _reference(x, w1, b1, w2, b2, bf16_matmul=True)
    err_bf16 = float(jnp.max(jnp.abs(out - ref_bf16)))
    assert err_bf16 < 1e-2, f"max abs err vs bf16-emulated ref = {err_bf16}"

    # Sanity check vs exact f32 module semantics (looser: bf16 MXU operands).
    ref_f32 = _reference(x, w1, b1, w2, b2, bf16_matmul=False)
    err_f32 = float(jnp.max(jnp.abs(out - ref_f32)))
    assert err_f32 < 5e-2, f"max abs err vs f32 ref = {err_f32}"

    print("KERNEL_OK")
</pallas_src>

<mosaic_0001>
module attributes {stable_mosaic.version = 11 : i64} {
  func.func @_resnet_block_kernel(%arg0: i32, %arg1: memref<1x4x256xf32, #tpu.memory_space<vmem>>, %arg2: memref<3x4x12xbf16, #tpu.memory_space<vmem>>, %arg3: memref<3x4x12xbf16, #tpu.memory_space<vmem>>, %arg4: memref<1x4x256xf32, #tpu.memory_space<vmem>>) attributes {dimension_semantics = [#tpu.dimension_semantics<parallel>], iteration_bounds = array<i64: 2>, scalar_prefetch = 0 : i64, scratch_operands = 0 : i64, tpu.core_type = #tpu.core_type<tc>, window_params = [{transform_indices = @transform_0, window_bounds = array<i64: 1, 4, 256>}, {pipeline_mode = #tpu.pipeline_mode<synchronous>, transform_indices = @transform_1, window_bounds = array<i64: 3, 4, 12>}, {pipeline_mode = #tpu.pipeline_mode<synchronous>, transform_indices = @transform_2, window_bounds = array<i64: 3, 4, 12>}, {transform_indices = @transform_3, window_bounds = array<i64: 1, 4, 256>}]} {
    %c0 = arith.constant 0 : index
    %c0_0 = arith.constant 0 : index
    %c0_1 = arith.constant 0 : index
    %0 = vector.load %arg1[%c0, %c0_0, %c0_1] : memref<1x4x256xf32, #tpu.memory_space<vmem>>, vector<1x4x256xf32>
    %1 = vector.shape_cast %0 : vector<1x4x256xf32> to vector<4x256xf32>
    %2 = tpu.iota {dimensions = array<i32: 1>} : vector<1x256xi32>
    %c16_i32 = arith.constant 16 : i32
    %c0_i32 = arith.constant 0 : i32
    %3 = arith.cmpi eq, %c16_i32, %c0_i32 : i32
    %c1_i32 = arith.constant 1 : i32
    %4 = arith.select %3, %c1_i32, %c16_i32 : i32
    %5 = vector.broadcast %4 : i32 to vector<1x256xi32>
    %6 = arith.remsi %2, %5 : vector<1x256xi32>
    %c0_i32_2 = arith.constant 0 : i32
    %7 = vector.broadcast %c0_i32_2 : i32 to vector<1x256xi32>
    %8 = arith.cmpi ne, %6, %7 : vector<1x256xi32>
    %c0_i32_3 = arith.constant 0 : i32
    %9 = vector.broadcast %c0_i32_3 : i32 to vector<1x256xi32>
    %10 = arith.cmpi slt, %6, %9 : vector<1x256xi32>
    %c0_i32_4 = arith.constant 0 : i32
    %11 = arith.cmpi slt, %4, %c0_i32_4 : i32
    %12 = vector.broadcast %11 : i1 to vector<1x256xi1>
    %13 = vector.broadcast %12 : vector<1x256xi1> to vector<1x256xi1>
    %14 = arith.xori %10, %13 : vector<1x256xi1>
    %15 = arith.andi %14, %8 : vector<1x256xi1>
    %16 = vector.broadcast %4 : i32 to vector<1x256xi32>
    %17 = arith.addi %6, %16 : vector<1x256xi32>
    %18 = arith.select %15, %17, %6 : vector<1x256xi1>, vector<1x256xi32>
    %c16_i32_5 = arith.constant 16 : i32
    %19 = vector.broadcast %c16_i32_5 : i32 to vector<1x256xi32>
    %20 = arith.cmpi slt, %2, %19 : vector<1x256xi32>
    %c240_i32 = arith.constant 240 : i32
    %21 = vector.broadcast %c240_i32 : i32 to vector<1x256xi32>
    %22 = arith.cmpi sge, %2, %21 : vector<1x256xi32>
    %c0_i32_6 = arith.constant 0 : i32
    %23 = vector.broadcast %c0_i32_6 : i32 to vector<1x256xi32>
    %24 = arith.cmpi eq, %18, %23 : vector<1x256xi32>
    %c15_i32 = arith.constant 15 : i32
    %25 = vector.broadcast %c15_i32 : i32 to vector<1x256xi32>
    %26 = arith.cmpi eq, %18, %25 : vector<1x256xi32>
    %c16_i32_7 = arith.constant 16 : i32
    %27 = tpu.dynamic_rotate %1 by %c16_i32_7 dim 1 : vector<4x256xf32>, i32 -> vector<4x256xf32>
    %c240_i32_8 = arith.constant 240 : i32
    %28 = tpu.dynamic_rotate %1 by %c240_i32_8 dim 1 : vector<4x256xf32>, i32 -> vector<4x256xf32>
    %29 = vector.shape_cast %20 : vector<1x256xi1> to vector<1x256xi1>
    %30 = vector.broadcast %29 : vector<1x256xi1> to vector<4x256xi1>
    %31 = arith.select %30, %28, %27 : vector<4x256xi1>, vector<4x256xf32>
    %32 = vector.shape_cast %22 : vector<1x256xi1> to vector<1x256xi1>
    %33 = vector.broadcast %32 : vector<1x256xi1> to vector<4x256xi1>
    %34 = arith.select %33, %27, %28 : vector<4x256xi1>, vector<4x256xf32>
    %c1_i32_9 = arith.constant 1 : i32
    %35 = tpu.dynamic_rotate %31 by %c1_i32_9 dim 1 : vector<4x256xf32>, i32 -> vector<4x256xf32>
    %c255_i32 = arith.constant 255 : i32
    %36 = tpu.dynamic_rotate %31 by %c255_i32 dim 1 : vector<4x256xf32>, i32 -> vector<4x256xf32>
    %37 = vector.shape_cast %24 : vector<1x256xi1> to vector<1x256xi1>
    %38 = vector.broadcast %37 : vector<1x256xi1> to vector<4x256xi1>
    %39 = arith.select %38, %36, %35 : vector<4x256xi1>, vector<4x256xf32>
    %40 = vector.shape_cast %26 : vector<1x256xi1> to vector<1x256xi1>
    %41 = vector.broadcast %40 : vector<1x256xi1> to vector<4x256xi1>
    %42 = arith.select %41, %35, %36 : vector<4x256xi1>, vector<4x256xf32>
    %43 = arith.truncf %39 : vector<4x256xf32> to vector<4x256xbf16>
    %44 = arith.truncf %31 : vector<4x256xf32> to vector<4x256xbf16>
    %45 = arith.truncf %42 : vector<4x256xf32> to vector<4x256xbf16>
    %46 = tpu.concatenate %43, %44, %45 in 0 : vector<4x256xbf16>, vector<4x256xbf16>, vector<4x256xbf16> -> vector<12x256xbf16>
    %c0_10 = arith.constant 0 : index
    %c0_11 = arith.constant 0 : index
    %c0_12 = arith.constant 0 : index
    %47 = vector.load %arg2[%c0_10, %c0_11, %c0_12] : memref<3x4x12xbf16, #tpu.memory_space<vmem>>, vector<1x4x12xbf16>
    %48 = vector.shape_cast %47 : vector<1x4x12xbf16> to vector<4x12xbf16>
    %cst = arith.constant dense<0.000000e+00> : vector<4x256xf32>
    %49 = tpu.matmul %48, %46, %cst {dimension_numbers = #tpu.dot_dimension_numbers<[1], [0], [0], [1], [0, 0, 1, 1], [], []>} : vector<4x12xbf16>, vector<12x256xbf16>, vector<4x256xf32> -> vector<4x256xf32>
    %c1_i32_13 = arith.constant 1 : i32
    %50 = tpu.dynamic_rotate %1 by %c1_i32_13 dim 1 : vector<4x256xf32>, i32 -> vector<4x256xf32>
    %c255_i32_14 = arith.constant 255 : i32
    %51 = tpu.dynamic_rotate %1 by %c255_i32_14 dim 1 : vector<4x256xf32>, i32 -> vector<4x256xf32>
    %52 = vector.shape_cast %24 : vector<1x256xi1> to vector<1x256xi1>
    %53 = vector.broadcast %52 : vector<1x256xi1> to vector<4x256xi1>
    %54 = arith.select %53, %51, %50 : vector<4x256xi1>, vector<4x256xf32>
    %55 = vector.shape_cast %26 : vector<1x256xi1> to vector<1x256xi1>
    %56 = vector.broadcast %55 : vector<1x256xi1> to vector<4x256xi1>
    %57 = arith.select %56, %50, %51 : vector<4x256xi1>, vector<4x256xf32>
    %58 = arith.truncf %54 : vector<4x256xf32> to vector<4x256xbf16>
    %59 = arith.truncf %1 : vector<4x256xf32> to vector<4x256xbf16>
    %60 = arith.truncf %57 : vector<4x256xf32> to vector<4x256xbf16>
    %61 = tpu.concatenate %58, %59, %60 in 0 : vector<4x256xbf16>, vector<4x256xbf16>, vector<4x256xbf16> -> vector<12x256xbf16>
    %c1 = arith.constant 1 : index
    %c0_15 = arith.constant 0 : index
    %c0_16 = arith.constant 0 : index
    %62 = vector.load %arg2[%c1, %c0_15, %c0_16] : memref<3x4x12xbf16, #tpu.memory_space<vmem>>, vector<1x4x12xbf16>
    %63 = vector.shape_cast %62 : vector<1x4x12xbf16> to vector<4x12xbf16>
    %cst_17 = arith.constant dense<0.000000e+00> : vector<4x256xf32>
    %64 = tpu.matmul %63, %61, %cst_17 {dimension_numbers = #tpu.dot_dimension_numbers<[1], [0], [0], [1], [0, 0, 1, 1], [], []>} : vector<4x12xbf16>, vector<12x256xbf16>, vector<4x256xf32> -> vector<4x256xf32>
    %65 = arith.addf %49, %64 : vector<4x256xf32>
    %c1_i32_18 = arith.constant 1 : i32
    %66 = tpu.dynamic_rotate %34 by %c1_i32_18 dim 1 : vector<4x256xf32>, i32 -> vector<4x256xf32>
    %c255_i32_19 = arith.constant 255 : i32
    %67 = tpu.dynamic_rotate %34 by %c255_i32_19 dim 1 : vector<4x256xf32>, i32 -> vector<4x256xf32>
    %68 = vector.shape_cast %24 : vector<1x256xi1> to vector<1x256xi1>
    %69 = vector.broadcast %68 : vector<1x256xi1> to vector<4x256xi1>
    %70 = arith.select %69, %67, %66 : vector<4x256xi1>, vector<4x256xf32>
    %71 = vector.shape_cast %26 : vector<1x256xi1> to vector<1x256xi1>
    %72 = vector.broadcast %71 : vector<1x256xi1> to vector<4x256xi1>
    %73 = arith.select %72, %66, %67 : vector<4x256xi1>, vector<4x256xf32>
    %74 = arith.truncf %70 : vector<4x256xf32> to vector<4x256xbf16>
    %75 = arith.truncf %34 : vector<4x256xf32> to vector<4x256xbf16>
    %76 = arith.truncf %73 : vector<4x256xf32> to vector<4x256xbf16>
    %77 = tpu.concatenate %74, %75, %76 in 0 : vector<4x256xbf16>, vector<4x256xbf16>, vector<4x256xbf16> -> vector<12x256xbf16>
    %c2 = arith.constant 2 : index
    %c0_20 = arith.constant 0 : index
    %c0_21 = arith.constant 0 : index
    %78 = vector.load %arg2[%c2, %c0_20, %c0_21] : memref<3x4x12xbf16, #tpu.memory_space<vmem>>, vector<1x4x12xbf16>
    %79 = vector.shape_cast %78 : vector<1x4x12xbf16> to vector<4x12xbf16>
    %cst_22 = arith.constant dense<0.000000e+00> : vector<4x256xf32>
    %80 = tpu.matmul %79, %77, %cst_22 {dimension_numbers = #tpu.dot_dimension_numbers<[1], [0], [0], [1], [0, 0, 1, 1], [], []>} : vector<4x12xbf16>, vector<12x256xbf16>, vector<4x256xf32> -> vector<4x256xf32>
    %81 = arith.addf %65, %80 : vector<4x256xf32>
    %cst_23 = arith.constant dense<0.000000e+00> : vector<4xf32>
    %82 = vector.multi_reduction <add>, %81, %cst_23 [1] : vector<4x256xf32> to vector<4xf32>
    %83 = vector.shape_cast %82 : vector<4xf32> to vector<4x1xf32>
    %cst_24 = arith.constant 3.906250e-03 : f32
    %84 = vector.broadcast %cst_24 : f32 to vector<4x1xf32>
    %85 = arith.mulf %83, %84 : vector<4x1xf32>
    %86 = vector.broadcast %85 : vector<4x1xf32> to vector<4x256xf32>
    %87 = arith.subf %81, %86 : vector<4x256xf32>
    %88 = arith.mulf %87, %87 : vector<4x256xf32>
    %cst_25 = arith.constant dense<0.000000e+00> : vector<4xf32>
    %89 = vector.multi_reduction <add>, %88, %cst_25 [1] : vector<4x256xf32> to vector<4xf32>
    %90 = vector.shape_cast %89 : vector<4xf32> to vector<4x1xf32>
    %cst_26 = arith.constant 3.906250e-03 : f32
    %91 = vector.broadcast %cst_26 : f32 to vector<4x1xf32>
    %92 = arith.mulf %90, %91 : vector<4x1xf32>
    %cst_27 = arith.constant 9.99999974E-6 : f32
    %93 = vector.broadcast %cst_27 : f32 to vector<4x1xf32>
    %94 = arith.addf %92, %93 : vector<4x1xf32>
    %95 = math.rsqrt %94 : vector<4x1xf32>
    %96 = vector.broadcast %95 : vector<4x1xf32> to vector<4x256xf32>
    %97 = arith.mulf %87, %96 : vector<4x256xf32>
    %c16_i32_28 = arith.constant 16 : i32
    %98 = tpu.dynamic_rotate %97 by %c16_i32_28 dim 1 : vector<4x256xf32>, i32 -> vector<4x256xf32>
    %c240_i32_29 = arith.constant 240 : i32
    %99 = tpu.dynamic_rotate %97 by %c240_i32_29 dim 1 : vector<4x256xf32>, i32 -> vector<4x256xf32>
    %100 = vector.shape_cast %20 : vector<1x256xi1> to vector<1x256xi1>
    %101 = vector.broadcast %100 : vector<1x256xi1> to vector<4x256xi1>
    %102 = arith.select %101, %99, %98 : vector<4x256xi1>, vector<4x256xf32>
    %103 = vector.shape_cast %22 : vector<1x256xi1> to vector<1x256xi1>
    %104 = vector.broadcast %103 : vector<1x256xi1> to vector<4x256xi1>
    %105 = arith.select %104, %98, %99 : vector<4x256xi1>, vector<4x256xf32>
    %c1_i32_30 = arith.constant 1 : i32
    %106 = tpu.dynamic_rotate %102 by %c1_i32_30 dim 1 : vector<4x256xf32>, i32 -> vector<4x256xf32>
    %c255_i32_31 = arith.constant 255 : i32
    %107 = tpu.dynamic_rotate %102 by %c255_i32_31 dim 1 : vector<4x256xf32>, i32 -> vector<4x256xf32>
    %108 = vector.shape_cast %24 : vector<1x256xi1> to vector<1x256xi1>
    %109 = vector.broadcast %108 : vector<1x256xi1> to vector<4x256xi1>
    %110 = arith.select %109, %107, %106 : vector<4x256xi1>, vector<4x256xf32>
    %111 = vector.shape_cast %26 : vector<1x256xi1> to vector<1x256xi1>
    %112 = vector.broadcast %111 : vector<1x256xi1> to vector<4x256xi1>
    %113 = arith.select %112, %106, %107 : vector<4x256xi1>, vector<4x256xf32>
    %114 = arith.truncf %110 : vector<4x256xf32> to vector<4x256xbf16>
    %115 = arith.truncf %102 : vector<4x256xf32> to vector<4x256xbf16>
    %116 = arith.truncf %113 : vector<4x256xf32> to vector<4x256xbf16>
    %117 = tpu.concatenate %114, %115, %116 in 0 : vector<4x256xbf16>, vector<4x256xbf16>, vector<4x256xbf16> -> vector<12x256xbf16>
    %c0_32 = arith.constant 0 : index
    %c0_33 = arith.constant 0 : index
    %c0_34 = arith.constant 0 : index
    %118 = vector.load %arg3[%c0_32, %c0_33, %c0_34] : memref<3x4x12xbf16, #tpu.memory_space<vmem>>, vector<1x4x12xbf16>
    %119 = vector.shape_cast %118 : vector<1x4x12xbf16> to vector<4x12xbf16>
    %cst_35 = arith.constant dense<0.000000e+00> : vector<4x256xf32>
    %120 = tpu.matmul %119, %117, %cst_35 {dimension_numbers = #tpu.dot_dimension_numbers<[1], [0], [0], [1], [0, 0, 1, 1], [], []>} : vector<4x12xbf16>, vector<12x256xbf16>, vector<4x256xf32> -> vector<4x256xf32>
    %c1_i32_36 = arith.constant 1 : i32
    %121 = tpu.dynamic_rotate %97 by %c1_i32_36 dim 1 : vector<4x256xf32>, i32 -> vector<4x256xf32>
    %c255_i32_37 = arith.constant 255 : i32
    %122 = tpu.dynamic_rotate %97 by %c255_i32_37 dim 1 : vector<4x256xf32>, i32 -> vector<4x256xf32>
    %123 = vector.shape_cast %24 : vector<1x256xi1> to vector<1x256xi1>
    %124 = vector.broadcast %123 : vector<1x256xi1> to vector<4x256xi1>
    %125 = arith.select %124, %122, %121 : vector<4x256xi1>, vector<4x256xf32>
    %126 = vector.shape_cast %26 : vector<1x256xi1> to vector<1x256xi1>
    %127 = vector.broadcast %126 : vector<1x256xi1> to vector<4x256xi1>
    %128 = arith.select %127, %121, %122 : vector<4x256xi1>, vector<4x256xf32>
    %129 = arith.truncf %125 : vector<4x256xf32> to vector<4x256xbf16>
    %130 = arith.truncf %97 : vector<4x256xf32> to vector<4x256xbf16>
    %131 = arith.truncf %128 : vector<4x256xf32> to vector<4x256xbf16>
    %132 = tpu.concatenate %129, %130, %131 in 0 : vector<4x256xbf16>, vector<4x256xbf16>, vector<4x256xbf16> -> vector<12x256xbf16>
    %c1_38 = arith.constant 1 : index
    %c0_39 = arith.constant 0 : index
    %c0_40 = arith.constant 0 : index
    %133 = vector.load %arg3[%c1_38, %c0_39, %c0_40] : memref<3x4x12xbf16, #tpu.memory_space<vmem>>, vector<1x4x12xbf16>
    %134 = vector.shape_cast %133 : vector<1x4x12xbf16> to vector<4x12xbf16>
    %cst_41 = arith.constant dense<0.000000e+00> : vector<4x256xf32>
    %135 = tpu.matmul %134, %132, %cst_41 {dimension_numbers = #tpu.dot_dimension_numbers<[1], [0], [0], [1], [0, 0, 1, 1], [], []>} : vector<4x12xbf16>, vector<12x256xbf16>, vector<4x256xf32> -> vector<4x256xf32>
    %136 = arith.addf %120, %135 : vector<4x256xf32>
    %c1_i32_42 = arith.constant 1 : i32
    %137 = tpu.dynamic_rotate %105 by %c1_i32_42 dim 1 : vector<4x256xf32>, i32 -> vector<4x256xf32>
    %c255_i32_43 = arith.constant 255 : i32
    %138 = tpu.dynamic_rotate %105 by %c255_i32_43 dim 1 : vector<4x256xf32>, i32 -> vector<4x256xf32>
    %139 = vector.shape_cast %24 : vector<1x256xi1> to vector<1x256xi1>
    %140 = vector.broadcast %139 : vector<1x256xi1> to vector<4x256xi1>
    %141 = arith.select %140, %138, %137 : vector<4x256xi1>, vector<4x256xf32>
    %142 = vector.shape_cast %26 : vector<1x256xi1> to vector<1x256xi1>
    %143 = vector.broadcast %142 : vector<1x256xi1> to vector<4x256xi1>
    %144 = arith.select %143, %137, %138 : vector<4x256xi1>, vector<4x256xf32>
    %145 = arith.truncf %141 : vector<4x256xf32> to vector<4x256xbf16>
    %146 = arith.truncf %105 : vector<4x256xf32> to vector<4x256xbf16>
    %147 = arith.truncf %144 : vector<4x256xf32> to vector<4x256xbf16>
    %148 = tpu.concatenate %145, %146, %147 in 0 : vector<4x256xbf16>, vector<4x256xbf16>, vector<4x256xbf16> -> vector<12x256xbf16>
    %c2_44 = arith.constant 2 : index
    %c0_45 = arith.constant 0 : index
    %c0_46 = arith.constant 0 : index
    %149 = vector.load %arg3[%c2_44, %c0_45, %c0_46] : memref<3x4x12xbf16, #tpu.memory_space<vmem>>, vector<1x4x12xbf16>
    %150 = vector.shape_cast %149 : vector<1x4x12xbf16> to vector<4x12xbf16>
    %cst_47 = arith.constant dense<0.000000e+00> : vector<4x256xf32>
    %151 = tpu.matmul %150, %148, %cst_47 {dimension_numbers = #tpu.dot_dimension_numbers<[1], [0], [0], [1], [0, 0, 1, 1], [], []>} : vector<4x12xbf16>, vector<12x256xbf16>, vector<4x256xf32> -> vector<4x256xf32>
    %152 = arith.addf %136, %151 : vector<4x256xf32>
    %cst_48 = arith.constant dense<0.000000e+00> : vector<4xf32>
    %153 = vector.multi_reduction <add>, %152, %cst_48 [1] : vector<4x256xf32> to vector<4xf32>
    %154 = vector.shape_cast %153 : vector<4xf32> to vector<4x1xf32>
    %cst_49 = arith.constant 3.906250e-03 : f32
    %155 = vector.broadcast %cst_49 : f32 to vector<4x1xf32>
    %156 = arith.mulf %154, %155 : vector<4x1xf32>
    %157 = vector.broadcast %156 : vector<4x1xf32> to vector<4x256xf32>
    %158 = arith.subf %152, %157 : vector<4x256xf32>
    %159 = arith.mulf %158, %158 : vector<4x256xf32>
    %cst_50 = arith.constant dense<0.000000e+00> : vector<4xf32>
    %160 = vector.multi_reduction <add>, %159, %cst_50 [1] : vector<4x256xf32> to vector<4xf32>
    %161 = vector.shape_cast %160 : vector<4xf32> to vector<4x1xf32>
    %cst_51 = arith.constant 3.906250e-03 : f32
    %162 = vector.broadcast %cst_51 : f32 to vector<4x1xf32>
    %163 = arith.mulf %161, %162 : vector<4x1xf32>
    %cst_52 = arith.constant 9.99999974E-6 : f32
    %164 = vector.broadcast %cst_52 : f32 to vector<4x1xf32>
    %165 = arith.addf %163, %164 : vector<4x1xf32>
    %166 = math.rsqrt %165 : vector<4x1xf32>
    %167 = vector.broadcast %166 : vector<4x1xf32> to vector<4x256xf32>
    %168 = arith.mulf %158, %167 : vector<4x256xf32>
    %cst_53 = arith.constant 0.000000e+00 : f32
    %169 = vector.broadcast %cst_53 : f32 to vector<4x256xf32>
    %170 = arith.maximumf %168, %169 : vector<4x256xf32>
    %171 = arith.addf %1, %170 : vector<4x256xf32>
    %c0_54 = arith.constant 0 : index
    %c0_55 = arith.constant 0 : index
    %c0_56 = arith.constant 0 : index
    %172 = vector.load %arg4[%c0_54, %c0_55, %c0_56] : memref<1x4x256xf32, #tpu.memory_space<vmem>>, vector<1x4x256xf32>
    %173 = vector.shape_cast %172 : vector<1x4x256xf32> to vector<4x256xf32>
    %174 = vector.shape_cast %171 : vector<4x256xf32> to vector<1x4x256xf32>
    tpu.vector_store %arg4[%c0_54, %c0_55, %c0_56], %174 {strides = array<i32>} : memref<1x4x256xf32, #tpu.memory_space<vmem>>, vector<1x4x256xf32>,
    return
  }
  func.func @transform_0(%arg0: i32) -> (i32, i32, i32) {
    %c0_i32 = arith.constant 0 : i32
    %c0_i32_0 = arith.constant 0 : i32
    %c0_i32_1 = arith.constant 0 : i32
    return %arg0, %c0_i32, %c0_i32_0 : i32, i32, i32
  }
  func.func @transform_1(%arg0: i32) -> (i32, i32, i32) {
    %c0_i32 = arith.constant 0 : i32
    %c0_i32_0 = arith.constant 0 : i32
    %c0_i32_1 = arith.constant 0 : i32
    %c0_i32_2 = arith.constant 0 : i32
    return %c0_i32, %c0_i32_0, %c0_i32_1 : i32, i32, i32
  }
  func.func @transform_2(%arg0: i32) -> (i32, i32, i32) {
    %c0_i32 = arith.constant 0 : i32
    %c0_i32_0 = arith.constant 0 : i32
    %c0_i32_1 = arith.constant 0 : i32
    %c0_i32_2 = arith.constant 0 : i32
    return %c0_i32, %c0_i32_0, %c0_i32_1 : i32, i32, i32
  }
  func.func @transform_3(%arg0: i32) -> (i32, i32, i32) {
    %c0_i32 = arith.constant 0 : i32
    %c0_i32_0 = arith.constant 0 : i32
    %c0_i32_1 = arith.constant 0 : i32
    return %arg0, %c0_i32, %c0_i32_0 : i32, i32, i32
  }
}

module attributes {stable_mosaic.version = 11 : i64} {
  func.func @_resnet_block_kernel(%arg0: i32, %arg1: memref<1x4x256xf32, #tpu.memory_space<vmem>>, %arg2: memref<3x4x12xbf16, #tpu.memory_space<vmem>>, %arg3: memref<3x4x12xbf16, #tpu.memory_space<vmem>>, %arg4: memref<1x4x256xf32, #tpu.memory_space<vmem>>) attributes {dimension_semantics = [#tpu.dimension_semantics<parallel>], iteration_bounds = array<i64: 2>, scalar_prefetch = 0 : i64, scratch_operands = 0 : i64, tpu.core_type = #tpu.core_type<tc>, window_params = [{transform_indices = @transform_0, window_bounds = array<i64: 1, 4, 256>}, {pipeline_mode = #tpu.pipeline_mode<synchronous>, transform_indices = @transform_1, window_bounds = array<i64: 3, 4, 12>}, {pipeline_mode = #tpu.pipeline_mode<synchronous>, transform_indices = @transform_2, window_bounds = array<i64: 3, 4, 12>}, {transform_indices = @transform_3, window_bounds = array<i64: 1, 4, 256>}]} {
    %c0 = arith.constant 0 : index
    %c0_0 = arith.constant 0 : index
    %c0_1 = arith.constant 0 : index
    %0 = vector.load %arg1[%c0, %c0_0, %c0_1] : memref<1x4x256xf32, #tpu.memory_space<vmem>>, vector<1x4x256xf32>
    %1 = vector.shape_cast %0 : vector<1x4x256xf32> to vector<4x256xf32>
    %2 = tpu.iota {dimensions = array<i32: 1>} : vector<1x256xi32>
    %c16_i32 = arith.constant 16 : i32
    %c0_i32 = arith.constant 0 : i32
    %3 = arith.cmpi eq, %c16_i32, %c0_i32 : i32
    %c1_i32 = arith.constant 1 : i32
    %4 = arith.select %3, %c1_i32, %c16_i32 : i32
    %5 = vector.broadcast %4 : i32 to vector<1x256xi32>
    %6 = arith.remsi %2, %5 : vector<1x256xi32>
    %c0_i32_2 = arith.constant 0 : i32
    %7 = vector.broadcast %c0_i32_2 : i32 to vector<1x256xi32>
    %8 = arith.cmpi ne, %6, %7 : vector<1x256xi32>
    %c0_i32_3 = arith.constant 0 : i32
    %9 = vector.broadcast %c0_i32_3 : i32 to vector<1x256xi32>
    %10 = arith.cmpi slt, %6, %9 : vector<1x256xi32>
    %c0_i32_4 = arith.constant 0 : i32
    %11 = arith.cmpi slt, %4, %c0_i32_4 : i32
    %12 = vector.broadcast %11 : i1 to vector<1x256xi1>
    %13 = vector.broadcast %12 : vector<1x256xi1> to vector<1x256xi1>
    %14 = arith.xori %10, %13 : vector<1x256xi1>
    %15 = arith.andi %14, %8 : vector<1x256xi1>
    %16 = vector.broadcast %4 : i32 to vector<1x256xi32>
    %17 = arith.addi %6, %16 : vector<1x256xi32>
    %18 = arith.select %15, %17, %6 : vector<1x256xi1>, vector<1x256xi32>
    %c16_i32_5 = arith.constant 16 : i32
    %19 = vector.broadcast %c16_i32_5 : i32 to vector<1x256xi32>
    %20 = arith.cmpi slt, %2, %19 : vector<1x256xi32>
    %c240_i32 = arith.constant 240 : i32
    %21 = vector.broadcast %c240_i32 : i32 to vector<1x256xi32>
    %22 = arith.cmpi sge, %2, %21 : vector<1x256xi32>
    %c0_i32_6 = arith.constant 0 : i32
    %23 = vector.broadcast %c0_i32_6 : i32 to vector<1x256xi32>
    %24 = arith.cmpi eq, %18, %23 : vector<1x256xi32>
    %c15_i32 = arith.constant 15 : i32
    %25 = vector.broadcast %c15_i32 : i32 to vector<1x256xi32>
    %26 = arith.cmpi eq, %18, %25 : vector<1x256xi32>
    %c16_i32_7 = arith.constant 16 : i32
    %27 = tpu.dynamic_rotate %1 by %c16_i32_7 dim 1 : vector<4x256xf32>, i32 -> vector<4x256xf32>
    %c240_i32_8 = arith.constant 240 : i32
    %28 = tpu.dynamic_rotate %1 by %c240_i32_8 dim 1 : vector<4x256xf32>, i32 -> vector<4x256xf32>
    %29 = vector.shape_cast %20 : vector<1x256xi1> to vector<1x256xi1>
    %30 = vector.broadcast %29 : vector<1x256xi1> to vector<4x256xi1>
    %31 = arith.select %30, %28, %27 : vector<4x256xi1>, vector<4x256xf32>
    %32 = vector.shape_cast %22 : vector<1x256xi1> to vector<1x256xi1>
    %33 = vector.broadcast %32 : vector<1x256xi1> to vector<4x256xi1>
    %34 = arith.select %33, %27, %28 : vector<4x256xi1>, vector<4x256xf32>
    %c1_i32_9 = arith.constant 1 : i32
    %35 = tpu.dynamic_rotate %31 by %c1_i32_9 dim 1 : vector<4x256xf32>, i32 -> vector<4x256xf32>
    %c255_i32 = arith.constant 255 : i32
    %36 = tpu.dynamic_rotate %31 by %c255_i32 dim 1 : vector<4x256xf32>, i32 -> vector<4x256xf32>
    %37 = vector.shape_cast %24 : vector<1x256xi1> to vector<1x256xi1>
    %38 = vector.broadcast %37 : vector<1x256xi1> to vector<4x256xi1>
    %39 = arith.select %38, %36, %35 : vector<4x256xi1>, vector<4x256xf32>
    %40 = vector.shape_cast %26 : vector<1x256xi1> to vector<1x256xi1>
    %41 = vector.broadcast %40 : vector<1x256xi1> to vector<4x256xi1>
    %42 = arith.select %41, %35, %36 : vector<4x256xi1>, vector<4x256xf32>
    %43 = arith.truncf %39 : vector<4x256xf32> to vector<4x256xbf16>
    %44 = arith.truncf %31 : vector<4x256xf32> to vector<4x256xbf16>
    %45 = arith.truncf %42 : vector<4x256xf32> to vector<4x256xbf16>
    %46 = tpu.concatenate %43, %44, %45 in 0 : vector<4x256xbf16>, vector<4x256xbf16>, vector<4x256xbf16> -> vector<12x256xbf16>
    %c0_10 = arith.constant 0 : index
    %c0_11 = arith.constant 0 : index
    %c0_12 = arith.constant 0 : index
    %47 = vector.load %arg2[%c0_10, %c0_11, %c0_12] : memref<3x4x12xbf16, #tpu.memory_space<vmem>>, vector<1x4x12xbf16>
    %48 = vector.shape_cast %47 : vector<1x4x12xbf16> to vector<4x12xbf16>
    %cst = arith.constant dense<0.000000e+00> : vector<4x256xf32>
    %49 = tpu.matmul %48, %46, %cst {dimension_numbers = #tpu.dot_dimension_numbers<[1], [0], [0], [1], [0, 0, 1, 1], [], []>} : vector<4x12xbf16>, vector<12x256xbf16>, vector<4x256xf32> -> vector<4x256xf32>
    %c1_i32_13 = arith.constant 1 : i32
    %50 = tpu.dynamic_rotate %1 by %c1_i32_13 dim 1 : vector<4x256xf32>, i32 -> vector<4x256xf32>
    %c255_i32_14 = arith.constant 255 : i32
    %51 = tpu.dynamic_rotate %1 by %c255_i32_14 dim 1 : vector<4x256xf32>, i32 -> vector<4x256xf32>
    %52 = vector.shape_cast %24 : vector<1x256xi1> to vector<1x256xi1>
    %53 = vector.broadcast %52 : vector<1x256xi1> to vector<4x256xi1>
    %54 = arith.select %53, %51, %50 : vector<4x256xi1>, vector<4x256xf32>
    %55 = vector.shape_cast %26 : vector<1x256xi1> to vector<1x256xi1>
    %56 = vector.broadcast %55 : vector<1x256xi1> to vector<4x256xi1>
    %57 = arith.select %56, %50, %51 : vector<4x256xi1>, vector<4x256xf32>
    %58 = arith.truncf %54 : vector<4x256xf32> to vector<4x256xbf16>
    %59 = arith.truncf %1 : vector<4x256xf32> to vector<4x256xbf16>
    %60 = arith.truncf %57 : vector<4x256xf32> to vector<4x256xbf16>
    %61 = tpu.concatenate %58, %59, %60 in 0 : vector<4x256xbf16>, vector<4x256xbf16>, vector<4x256xbf16> -> vector<12x256xbf16>
    %c1 = arith.constant 1 : index
    %c0_15 = arith.constant 0 : index
    %c0_16 = arith.constant 0 : index
    %62 = vector.load %arg2[%c1, %c0_15, %c0_16] : memref<3x4x12xbf16, #tpu.memory_space<vmem>>, vector<1x4x12xbf16>
    %63 = vector.shape_cast %62 : vector<1x4x12xbf16> to vector<4x12xbf16>
    %cst_17 = arith.constant dense<0.000000e+00> : vector<4x256xf32>
    %64 = tpu.matmul %63, %61, %cst_17 {dimension_numbers = #tpu.dot_dimension_numbers<[1], [0], [0], [1], [0, 0, 1, 1], [], []>} : vector<4x12xbf16>, vector<12x256xbf16>, vector<4x256xf32> -> vector<4x256xf32>
    %65 = arith.addf %49, %64 : vector<4x256xf32>
    %c1_i32_18 = arith.constant 1 : i32
    %66 = tpu.dynamic_rotate %34 by %c1_i32_18 dim 1 : vector<4x256xf32>, i32 -> vector<4x256xf32>
    %c255_i32_19 = arith.constant 255 : i32
    %67 = tpu.dynamic_rotate %34 by %c255_i32_19 dim 1 : vector<4x256xf32>, i32 -> vector<4x256xf32>
    %68 = vector.shape_cast %24 : vector<1x256xi1> to vector<1x256xi1>
    %69 = vector.broadcast %68 : vector<1x256xi1> to vector<4x256xi1>
    %70 = arith.select %69, %67, %66 : vector<4x256xi1>, vector<4x256xf32>
    %71 = vector.shape_cast %26 : vector<1x256xi1> to vector<1x256xi1>
    %72 = vector.broadcast %71 : vector<1x256xi1> to vector<4x256xi1>
    %73 = arith.select %72, %66, %67 : vector<4x256xi1>, vector<4x256xf32>
    %74 = arith.truncf %70 : vector<4x256xf32> to vector<4x256xbf16>
    %75 = arith.truncf %34 : vector<4x256xf32> to vector<4x256xbf16>
    %76 = arith.truncf %73 : vector<4x256xf32> to vector<4x256xbf16>
    %77 = tpu.concatenate %74, %75, %76 in 0 : vector<4x256xbf16>, vector<4x256xbf16>, vector<4x256xbf16> -> vector<12x256xbf16>
    %c2 = arith.constant 2 : index
    %c0_20 = arith.constant 0 : index
    %c0_21 = arith.constant 0 : index
    %78 = vector.load %arg2[%c2, %c0_20, %c0_21] : memref<3x4x12xbf16, #tpu.memory_space<vmem>>, vector<1x4x12xbf16>
    %79 = vector.shape_cast %78 : vector<1x4x12xbf16> to vector<4x12xbf16>
    %cst_22 = arith.constant dense<0.000000e+00> : vector<4x256xf32>
    %80 = tpu.matmul %79, %77, %cst_22 {dimension_numbers = #tpu.dot_dimension_numbers<[1], [0], [0], [1], [0, 0, 1, 1], [], []>} : vector<4x12xbf16>, vector<12x256xbf16>, vector<4x256xf32> -> vector<4x256xf32>
    %81 = arith.addf %65, %80 : vector<4x256xf32>
    %cst_23 = arith.constant dense<0.000000e+00> : vector<4xf32>
    %82 = vector.multi_reduction <add>, %81, %cst_23 [1] : vector<4x256xf32> to vector<4xf32>
    %83 = vector.shape_cast %82 : vector<4xf32> to vector<4x1xf32>
    %cst_24 = arith.constant 3.906250e-03 : f32
    %84 = vector.broadcast %cst_24 : f32 to vector<4x1xf32>
    %85 = arith.mulf %83, %84 : vector<4x1xf32>
    %86 = vector.broadcast %85 : vector<4x1xf32> to vector<4x256xf32>
    %87 = arith.subf %81, %86 : vector<4x256xf32>
    %88 = arith.mulf %87, %87 : vector<4x256xf32>
    %cst_25 = arith.constant dense<0.000000e+00> : vector<4xf32>
    %89 = vector.multi_reduction <add>, %88, %cst_25 [1] : vector<4x256xf32> to vector<4xf32>
    %90 = vector.shape_cast %89 : vector<4xf32> to vector<4x1xf32>
    %cst_26 = arith.constant 3.906250e-03 : f32
    %91 = vector.broadcast %cst_26 : f32 to vector<4x1xf32>
    %92 = arith.mulf %90, %91 : vector<4x1xf32>
    %cst_27 = arith.constant 9.99999974E-6 : f32
    %93 = vector.broadcast %cst_27 : f32 to vector<4x1xf32>
    %94 = arith.addf %92, %93 : vector<4x1xf32>
    %95 = math.rsqrt %94 : vector<4x1xf32>
    %96 = vector.broadcast %95 : vector<4x1xf32> to vector<4x256xf32>
    %97 = arith.mulf %87, %96 : vector<4x256xf32>
    %c16_i32_28 = arith.constant 16 : i32
    %98 = tpu.dynamic_rotate %97 by %c16_i32_28 dim 1 : vector<4x256xf32>, i32 -> vector<4x256xf32>
    %c240_i32_29 = arith.constant 240 : i32
    %99 = tpu.dynamic_rotate %97 by %c240_i32_29 dim 1 : vector<4x256xf32>, i32 -> vector<4x256xf32>
    %100 = vector.shape_cast %20 : vector<1x256xi1> to vector<1x256xi1>
    %101 = vector.broadcast %100 : vector<1x256xi1> to vector<4x256xi1>
    %102 = arith.select %101, %99, %98 : vector<4x256xi1>, vector<4x256xf32>
    %103 = vector.shape_cast %22 : vector<1x256xi1> to vector<1x256xi1>
    %104 = vector.broadcast %103 : vector<1x256xi1> to vector<4x256xi1>
    %105 = arith.select %104, %98, %99 : vector<4x256xi1>, vector<4x256xf32>
    %c1_i32_30 = arith.constant 1 : i32
    %106 = tpu.dynamic_rotate %102 by %c1_i32_30 dim 1 : vector<4x256xf32>, i32 -> vector<4x256xf32>
    %c255_i32_31 = arith.constant 255 : i32
    %107 = tpu.dynamic_rotate %102 by %c255_i32_31 dim 1 : vector<4x256xf32>, i32 -> vector<4x256xf32>
    %108 = vector.shape_cast %24 : vector<1x256xi1> to vector<1x256xi1>
    %109 = vector.broadcast %108 : vector<1x256xi1> to vector<4x256xi1>
    %110 = arith.select %109, %107, %106 : vector<4x256xi1>, vector<4x256xf32>
    %111 = vector.shape_cast %26 : vector<1x256xi1> to vector<1x256xi1>
    %112 = vector.broadcast %111 : vector<1x256xi1> to vector<4x256xi1>
    %113 = arith.select %112, %106, %107 : vector<4x256xi1>, vector<4x256xf32>
    %114 = arith.truncf %110 : vector<4x256xf32> to vector<4x256xbf16>
    %115 = arith.truncf %102 : vector<4x256xf32> to vector<4x256xbf16>
    %116 = arith.truncf %113 : vector<4x256xf32> to vector<4x256xbf16>
    %117 = tpu.concatenate %114, %115, %116 in 0 : vector<4x256xbf16>, vector<4x256xbf16>, vector<4x256xbf16> -> vector<12x256xbf16>
    %c0_32 = arith.constant 0 : index
    %c0_33 = arith.constant 0 : index
    %c0_34 = arith.constant 0 : index
    %118 = vector.load %arg3[%c0_32, %c0_33, %c0_34] : memref<3x4x12xbf16, #tpu.memory_space<vmem>>, vector<1x4x12xbf16>
    %119 = vector.shape_cast %118 : vector<1x4x12xbf16> to vector<4x12xbf16>
    %cst_35 = arith.constant dense<0.000000e+00> : vector<4x256xf32>
    %120 = tpu.matmul %119, %117, %cst_35 {dimension_numbers = #tpu.dot_dimension_numbers<[1], [0], [0], [1], [0, 0, 1, 1], [], []>} : vector<4x12xbf16>, vector<12x256xbf16>, vector<4x256xf32> -> vector<4x256xf32>
    %c1_i32_36 = arith.constant 1 : i32
    %121 = tpu.dynamic_rotate %97 by %c1_i32_36 dim 1 : vector<4x256xf32>, i32 -> vector<4x256xf32>
    %c255_i32_37 = arith.constant 255 : i32
    %122 = tpu.dynamic_rotate %97 by %c255_i32_37 dim 1 : vector<4x256xf32>, i32 -> vector<4x256xf32>
    %123 = vector.shape_cast %24 : vector<1x256xi1> to vector<1x256xi1>
    %124 = vector.broadcast %123 : vector<1x256xi1> to vector<4x256xi1>
    %125 = arith.select %124, %122, %121 : vector<4x256xi1>, vector<4x256xf32>
    %126 = vector.shape_cast %26 : vector<1x256xi1> to vector<1x256xi1>
    %127 = vector.broadcast %126 : vector<1x256xi1> to vector<4x256xi1>
    %128 = arith.select %127, %121, %122 : vector<4x256xi1>, vector<4x256xf32>
    %129 = arith.truncf %125 : vector<4x256xf32> to vector<4x256xbf16>
    %130 = arith.truncf %97 : vector<4x256xf32> to vector<4x256xbf16>
    %131 = arith.truncf %128 : vector<4x256xf32> to vector<4x256xbf16>
    %132 = tpu.concatenate %129, %130, %131 in 0 : vector<4x256xbf16>, vector<4x256xbf16>, vector<4x256xbf16> -> vector<12x256xbf16>
    %c1_38 = arith.constant 1 : index
    %c0_39 = arith.constant 0 : index
    %c0_40 = arith.constant 0 : index
    %133 = vector.load %arg3[%c1_38, %c0_39, %c0_40] : memref<3x4x12xbf16, #tpu.memory_space<vmem>>, vector<1x4x12xbf16>
    %134 = vector.shape_cast %133 : vector<1x4x12xbf16> to vector<4x12xbf16>
    %cst_41 = arith.constant dense<0.000000e+00> : vector<4x256xf32>
    %135 = tpu.matmul %134, %132, %cst_41 {dimension_numbers = #tpu.dot_dimension_numbers<[1], [0], [0], [1], [0, 0, 1, 1], [], []>} : vector<4x12xbf16>, vector<12x256xbf16>, vector<4x256xf32> -> vector<4x256xf32>
    %136 = arith.addf %120, %135 : vector<4x256xf32>
    %c1_i32_42 = arith.constant 1 : i32
    %137 = tpu.dynamic_rotate %105 by %c1_i32_42 dim 1 : vector<4x256xf32>, i32 -> vector<4x256xf32>
    %c255_i32_43 = arith.constant 255 : i32
    %138 = tpu.dynamic_rotate %105 by %c255_i32_43 dim 1 : vector<4x256xf32>, i32 -> vector<4x256xf32>
    %139 = vector.shape_cast %24 : vector<1x256xi1> to vector<1x256xi1>
    %140 = vector.broadcast %139 : vector<1x256xi1> to vector<4x256xi1>
    %141 = arith.select %140, %138, %137 : vector<4x256xi1>, vector<4x256xf32>
    %142 = vector.shape_cast %26 : vector<1x256xi1> to vector<1x256xi1>
    %143 = vector.broadcast %142 : vector<1x256xi1> to vector<4x256xi1>
    %144 = arith.select %143, %137, %138 : vector<4x256xi1>, vector<4x256xf32>
    %145 = arith.truncf %141 : vector<4x256xf32> to vector<4x256xbf16>
    %146 = arith.truncf %105 : vector<4x256xf32> to vector<4x256xbf16>
    %147 = arith.truncf %144 : vector<4x256xf32> to vector<4x256xbf16>
    %148 = tpu.concatenate %145, %146, %147 in 0 : vector<4x256xbf16>, vector<4x256xbf16>, vector<4x256xbf16> -> vector<12x256xbf16>
    %c2_44 = arith.constant 2 : index
    %c0_45 = arith.constant 0 : index
    %c0_46 = arith.constant 0 : index
    %149 = vector.load %arg3[%c2_44, %c0_45, %c0_46] : memref<3x4x12xbf16, #tpu.memory_space<vmem>>, vector<1x4x12xbf16>
    %150 = vector.shape_cast %149 : vector<1x4x12xbf16> to vector<4x12xbf16>
    %cst_47 = arith.constant dense<0.000000e+00> : vector<4x256xf32>
    %151 = tpu.matmul %150, %148, %cst_47 {dimension_numbers = #tpu.dot_dimension_numbers<[1], [0], [0], [1], [0, 0, 1, 1], [], []>} : vector<4x12xbf16>, vector<12x256xbf16>, vector<4x256xf32> -> vector<4x256xf32>
    %152 = arith.addf %136, %151 : vector<4x256xf32>
    %cst_48 = arith.constant dense<0.000000e+00> : vector<4xf32>
    %153 = vector.multi_reduction <add>, %152, %cst_48 [1] : vector<4x256xf32> to vector<4xf32>
    %154 = vector.shape_cast %153 : vector<4xf32> to vector<4x1xf32>
    %cst_49 = arith.constant 3.906250e-03 : f32
    %155 = vector.broadcast %cst_49 : f32 to vector<4x1xf32>
    %156 = arith.mulf %154, %155 : vector<4x1xf32>
    %157 = vector.broadcast %156 : vector<4x1xf32> to vector<4x256xf32>
    %158 = arith.subf %152, %157 : vector<4x256xf32>
    %159 = arith.mulf %158, %158 : vector<4x256xf32>
    %cst_50 = arith.constant dense<0.000000e+00> : vector<4xf32>
    %160 = vector.multi_reduction <add>, %159, %cst_50 [1] : vector<4x256xf32> to vector<4xf32>
    %161 = vector.shape_cast %160 : vector<4xf32> to vector<4x1xf32>
    %cst_51 = arith.constant 3.906250e-03 : f32
    %162 = vector.broadcast %cst_51 : f32 to vector<4x1xf32>
    %163 = arith.mulf %161, %162 : vector<4x1xf32>
    %cst_52 = arith.constant 9.99999974E-6 : f32
    %164 = vector.broadcast %cst_52 : f32 to vector<4x1xf32>
    %165 = arith.addf %163, %164 : vector<4x1xf32>
    %166 = math.rsqrt %165 : vector<4x1xf32>
    %167 = vector.broadcast %166 : vector<4x1xf32> to vector<4x256xf32>
    %168 = arith.mulf %158, %167 : vector<4x256xf32>
    %cst_53 = arith.constant 0.000000e+00 : f32
    %169 = vector.broadcast %cst_53 : f32 to vector<4x256xf32>
    %170 = arith.maximumf %168, %169 : vector<4x256xf32>
    %171 = arith.addf %1, %170 : vector<4x256xf32>
    %c0_54 = arith.constant 0 : index
    %c0_55 = arith.constant 0 : index
    %c0_56 = arith.constant 0 : index
    %172 = vector.load %arg4[%c0_54, %c0_55, %c0_56] : memref<1x4x256xf32, #tpu.memory_space<vmem>>, vector<1x4x256xf32>
    %173 = vector.shape_cast %172 : vector<1x4x256xf32> to vector<4x256xf32>
    %174 = vector.shape_cast %171 : vector<4x256xf32> to vector<1x4x256xf32>
    tpu.vector_store %arg4[%c0_54, %c0_55, %c0_56], %174 {strides = array<i32>} : memref<1x4x256xf32, #tpu.memory_space<vmem>>, vector<1x4x256xf32>,
    return
  }
  func.func @transform_0(%arg0: i32) -> (i32, i32, i32) {
    %c0_i32 = arith.constant 0 : i32
    %c0_i32_0 = arith.constant 0 : i32
    %c0_i32_1 = arith.constant 0 : i32
    return %arg0, %c0_i32, %c0_i32_0 : i32, i32, i32
  }
  func.func @transform_1(%arg0: i32) -> (i32, i32, i32) {
    %c0_i32 = arith.constant 0 : i32
    %c0_i32_0 = arith.constant 0 : i32
    %c0_i32_1 = arith.constant 0 : i32
    %c0_i32_2 = arith.constant 0 : i32
    return %c0_i32, %c0_i32_0, %c0_i32_1 : i32, i32, i32
  }
  func.func @transform_2(%arg0: i32) -> (i32, i32, i32) {
    %c0_i32 = arith.constant 0 : i32
    %c0_i32_0 = arith.constant 0 : i32
    %c0_i32_1 = arith.constant 0 : i32
    %c0_i32_2 = arith.constant 0 : i32
    return %c0_i32, %c0_i32_0, %c0_i32_1 : i32, i32, i32
  }
  func.func @transform_3(%arg0: i32) -> (i32, i32, i32) {
    %c0_i32 = arith.constant 0 : i32
    %c0_i32_0 = arith.constant 0 : i32
    %c0_i32_1 = arith.constant 0 : i32
    return %arg0, %c0_i32, %c0_i32_0 : i32, i32, i32
  }
}

</mosaic_0001>

<llo_original>
// kernel: tpu_custom_call.1
$region0: #{tpu_custom_call.1}
  #allocation0 [shape = 'u32[]', space=smem, size = 0x4, offset = 0x4, fixed_abs, tag = 'smem constant byte address 0x4 - core index']
  #allocation1 [shape = 'u32[144,128]{1,0:T(1,128)}', space=vmem, size = 0x12000, scoped, tag = 'internal scratch']
  %s0 = inlined_call_operand.hbm [shape: f32[2,4,256], index: 0, kind: input, shape index: {}]
  %s1 = inlined_call_operand.hbm [shape: bf16[3,4,12], index: 1, kind: input, shape index: {}]
  %s2 = inlined_call_operand.hbm [shape: bf16[3,4,12], index: 2, kind: input, shape index: {}]
  %s3 = inlined_call_operand.hbm [shape: f32[2,4,256], index: 3, kind: output, shape index: {}]
  %s4 = sld [smem:[#allocation0]]
  $region57: #{tpu_custom_call.1} parent=0
    _
  %s6 = ssub.s32 1, %s4
  %s7 = scalar_select 0, %s6, %s4
  $region1: #{tpu_custom_call.1} parent=0
    #allocation2 [shape = 'u8[8192]{0}', space=vmem, size = 0x2000, scoped, tag = 'input window, operand 0']
    #allocation3 [shape = 's32[2]{0}', space=sflag, size = 0x8, scoped, tag = 'scoped memory for tpu_custom_call.1']
    #allocation4 [shape = 's32[2]{0}', space=sflag, size = 0x8, scoped, tag = 'scoped memory for tpu_custom_call.1']
    #allocation5 [shape = 'u8[3072]{0}', space=vmem, size = 0xc00, scoped, tag = 'input window, operand 1, single buffered']
    #allocation6 [shape = 's32[1]{0}', space=sflag, size = 0x4, scoped, tag = 'scoped memory for tpu_custom_call.1']
    #allocation7 [shape = 'u8[3072]{0}', space=vmem, size = 0xc00, scoped, tag = 'input window, operand 2, single buffered']
    #allocation8 [shape = 'u8[8192]{0}', space=vmem, size = 0x2000, scoped, tag = 'output window, operand 0']
    %8 = vsyncpa [#allocation3], 0
    %s9 = scalar_lea.sflag [#allocation3], 1
    %10 = vsyncpa %s9, 0
    %11 = vsyncpa [#allocation6], 0
    %12 = vsyncpa [#allocation4], 0
    %s13 = scalar_lea.sflag [#allocation4], 1
    %14 = vsyncpa %s13, 0
    loop: start=0, step=1, limit=4
    $region2: #{tpu_custom_call.1} parent=1 // loop_pre_header
      _
    $region3: #{tpu_custom_call.1} parent=1 // loop_header
      %s16 = sphi 0, %s20
      %p17 = scmp.ge.s32.totalorder %s16, 4
      %s26 = sphi 0, %s28
      %s29 = sphi 0, %s26
      %s30 = sphi 0, %s29
      %s46 = sphi 0, %s30
      %s50 = sphi 0, %s50
      %s52 = sphi 0, %s50
      %s53 = sphi 0, %s52
      %s67 = sphi 0, %s53
      %s71 = sphi 0, %s71
      %s73 = sphi 0, %s71
      %s74 = sphi 0, %s73
      %s88 = sphi 0, %s74
      %s94 = sphi 0, %s96
      %s97 = sphi 0, %s94
      %s98 = sphi 0, %s97
      %s114 = sphi 0, %s98
    $region4: #{tpu_custom_call.1} parent=1 // loop_header_branch
      %19 = sbr.rel (%p17) target = $region8
    $region5: #{tpu_custom_call.1} parent=1 // loop_body
      %s21 = ssub.s32 %s16, 1
      %s22 = ssub.s32 %s16, 2
      %s23 = sadd.s32 %s16, 1
      %s24 = ssub.s32 %s16, %s23
      %p25 = scmp.eq.s32.totalorder %s24, 0
      %s27 = sadd.s32 %s26, 1
      %s28 = scalar_select %p25, %s26, %s27
      %p31 = pneg %p25
      %p32 = scmp.eq.s32.totalorder %s16, 1
      %p33 = por %p31, %p32
      %p34 = scmp.ne.s32.totalorder %s26, %s29
      %p35 = scmp.eq.s32.totalorder %s16, 0
      %p36 = por %p34, %p35
      %p37 = scmp.ne.s32.totalorder %s26, %s29
      %p38 = scmp.eq.s32.totalorder %s21, 1
      %p39 = por %p37, %p38
      %p40 = scmp.ne.s32.totalorder %s29, %s30
      %p41 = scmp.eq.s32.totalorder %s21, 0
      %p42 = por %p40, %p41
      %p43 = scmp.ne.s32.totalorder %s29, %s30
      %p44 = scmp.eq.s32.totalorder %s22, 1
      %p45 = por %p43, %p44
      %p47 = scmp.ne.s32.totalorder %s30, %s46
      %p48 = scmp.eq.s32.totalorder %s22, 0
      %p49 = por %p47, %p48
      %s51 = sadd.s32 %s50, 1
      %p54 = scmp.eq.s32.totalorder %s16, 1
      %p55 = scmp.ne.s32.totalorder %s50, %s52
      %p56 = scmp.eq.s32.totalorder %s16, 0
      %p57 = por %p55, %p56
      %p58 = scmp.ne.s32.totalorder %s50, %s52
      %p59 = scmp.eq.s32.totalorder %s21, 1
      %p60 = por %p58, %p59
      %p61 = scmp.ne.s32.totalorder %s52, %s53
      %p62 = scmp.eq.s32.totalorder %s21, 0
      %p63 = por %p61, %p62
      %p64 = scmp.ne.s32.totalorder %s52, %s53
      %p65 = scmp.eq.s32.totalorder %s22, 1
      %p66 = por %p64, %p65
      %p68 = scmp.ne.s32.totalorder %s53, %s67
      %p69 = scmp.eq.s32.totalorder %s22, 0
      %p70 = por %p68, %p69
      %s72 = sadd.s32 %s71, 1
      %p75 = scmp.eq.s32.totalorder %s16, 1
      %p76 = scmp.ne.s32.totalorder %s71, %s73
      %p77 = scmp.eq.s32.totalorder %s16, 0
      %p78 = por %p76, %p77
      %p79 = scmp.ne.s32.totalorder %s71, %s73
      %p80 = scmp.eq.s32.totalorder %s21, 1
      %p81 = por %p79, %p80
      %p82 = scmp.ne.s32.totalorder %s73, %s74
      %p83 = scmp.eq.s32.totalorder %s21, 0
      %p84 = por %p82, %p83
      %p85 = scmp.ne.s32.totalorder %s73, %s74
      %p86 = scmp.eq.s32.totalorder %s22, 1
      %p87 = por %p85, %p86
      %p89 = scmp.ne.s32.totalorder %s74, %s88
      %p90 = scmp.eq.s32.totalorder %s22, 0
      %p91 = por %p89, %p90
      %s92 = ssub.s32 %s16, %s23
      %p93 = scmp.eq.s32.totalorder %s92, 0
      %s95 = sadd.s32 %s94, 1
      %s96 = scalar_select %p93, %s94, %s95
      %p99 = pneg %p93
      %p100 = scmp.eq.s32.totalorder %s16, 1
      %p101 = por %p99, %p100
      %p102 = scmp.ne.s32.totalorder %s94, %s97
      %p103 = scmp.eq.s32.totalorder %s16, 0
      %p104 = por %p102, %p103
      %p105 = scmp.ne.s32.totalorder %s94, %s97
      %p106 = scmp.eq.s32.totalorder %s21, 1
      %p107 = por %p105, %p106
      %p108 = scmp.ne.s32.totalorder %s97, %s98
      %p109 = scmp.eq.s32.totalorder %s21, 0
      %p110 = por %p108, %p109
      %p111 = scmp.ne.s32.totalorder %s97, %s98
      %p112 = scmp.eq.s32.totalorder %s22, 1
      %p113 = por %p111, %p112
      %p115 = scmp.ne.s32.totalorder %s98, %s114
      %p116 = scmp.eq.s32.totalorder %s22, 0
      %p117 = por %p115, %p116
      %p118 = scmp.le.s32.totalorder 1, %s16
      %p119 = scmp.lt.s32.totalorder %s16, 3
      %p120 = pnand %p118, %p119
      %p121 = pneg %p120
      // Predicated region
      $region9: #{tpu_custom_call.1} parent=5 // pred_check
        _
      $region10: #{tpu_custom_call.1} parent=5 // pred_check_branch
        %123 = sbr.rel (%p120) target = $region12
      $region11: #{tpu_custom_call.1} parent=5 // pred_region
        %s124 = ssub.s32 %s16, 1
        // Predicated region
        $region13: #{tpu_custom_call.1} parent=11 // pred_check
          %p125 = pneg %p63
        $region14: #{tpu_custom_call.1} parent=11 // pred_check_branch
          %127 = sbr.rel (%p125) target = $region16
        $region15: #{tpu_custom_call.1} parent=11 // pred_region
          %s129 = ssub.s32 96, 96
          %130 = vsyncadd [#allocation6], %s129
          %s131 = sshll.u32 [#allocation5], 4
          %s132 = int_to_ptr.vmem [resolvable:$true] %s131
          %137 = dma.hbm_to_vmem [thread:$0]  %s1, 96, %s132, [#allocation6], 32, 32, 2
        $region16: #{tpu_custom_call.1} parent=11 // pred_fallthru
          _
        // Predicated region
        $region17: #{tpu_custom_call.1} parent=11 // pred_check
          %p138 = pneg %p84
        $region18: #{tpu_custom_call.1} parent=11 // pred_check_branch
          %140 = sbr.rel (%p138) target = $region20
        $region19: #{tpu_custom_call.1} parent=11 // pred_region
          %s142 = ssub.s32 96, 96
          %143 = vsyncadd [#allocation6], %s142
          %s144 = sshll.u32 [#allocation7], 4
          %s145 = int_to_ptr.vmem [resolvable:$true] %s144
          %150 = dma.hbm_to_vmem [thread:$0]  %s2, 96, %s145, [#allocation6], 32, 32, 2
        $region20: #{tpu_custom_call.1} parent=11 // pred_fallthru
          _
      $region12: #{tpu_custom_call.1} parent=5 // pred_fallthru
        _
      %p151 = scmp.lt.s32.totalorder %s16, 2
      // Predicated region
      $region21: #{tpu_custom_call.1} parent=5 // pred_check
        %p152 = pneg %p151
      $region22: #{tpu_custom_call.1} parent=5 // pred_check_branch
        %154 = sbr.rel (%p152) target = $region24
      $region23: #{tpu_custom_call.1} parent=5 // pred_region
        // Predicated region
        $region25: #{tpu_custom_call.1} parent=23 // pred_check
          %p155 = pneg %p36
        $region26: #{tpu_custom_call.1} parent=23 // pred_check_branch
          %157 = sbr.rel (%p155) target = $region28
        $region27: #{tpu_custom_call.1} parent=23 // pred_region
          %s158 = sand.u32 %s26, 1
          %s159 = scalar_lea.sflag [#allocation3], %s158
          %s160 = sand.u32 %s26, 1
          %s161 = smul.addr %s160, 8
          %s162 = scalar_lea.vmem [#allocation2], %s161
          %s164 = ssub.s32 128, 128
          %165 = vsyncadd %s159, %s164
          %s166 = smul.addr %s16, 2
          %s167 = smul.addr %s166, 64
          %s168 = scalar_lea.hbm %s0, %s167
          %s170 = sshll.u32 %s162, 4
          %s171 = int_to_ptr.vmem [resolvable:$true] %s170
          %173 = dma.hbm_to_vmem [thread:$0]  %s168, 128, %s171, %s159
        $region28: #{tpu_custom_call.1} parent=23 // pred_fallthru
          _
      $region24: #{tpu_custom_call.1} parent=5 // pred_fallthru
        _
      %p174 = scmp.le.s32.totalorder 1, %s16
      %p175 = scmp.lt.s32.totalorder %s16, 3
      %p176 = pnand %p174, %p175
      %p177 = pneg %p176
      // Predicated region
      $region29: #{tpu_custom_call.1} parent=5 // pred_check
        _
      $region30: #{tpu_custom_call.1} parent=5 // pred_check_branch
        %179 = sbr.rel (%p176) target = $region32
      $region31: #{tpu_custom_call.1} parent=5 // pred_region
        %s180 = ssub.s32 %s16, 1
        %s181 = sand.u32 %s29, 1
        %s182 = scalar_lea.sflag [#allocation3], %s181
        %s183 = sand.u32 %s29, 1
        %s184 = smul.addr %s183, 8
        %s185 = scalar_lea.vmem [#allocation2], %s184
        // Predicated region
        $region33: #{tpu_custom_call.1} parent=31 // pred_check
          %p186 = pneg %p42
        $region34: #{tpu_custom_call.1} parent=31 // pred_check_branch
          %188 = sbr.rel (%p186) target = $region36
        $region35: #{tpu_custom_call.1} parent=31 // pred_region
          %189 = dma.done %s182, 128
        $region36: #{tpu_custom_call.1} parent=31 // pred_fallthru
          _
        // Predicated region
        $region37: #{tpu_custom_call.1} parent=31 // pred_check
          %p190 = pneg %p63
        $region38: #{tpu_custom_call.1} parent=31 // pred_check_branch
          %192 = sbr.rel (%p190) target = $region40
        $region39: #{tpu_custom_call.1} parent=31 // pred_region
          %193 = dma.done [#allocation6], 96
        $region40: #{tpu_custom_call.1} parent=31 // pred_fallthru
          _
        // Predicated region
        $region41: #{tpu_custom_call.1} parent=31 // pred_check
          %p194 = pneg %p84
        $region42: #{tpu_custom_call.1} parent=31 // pred_check_branch
          %196 = sbr.rel (%p194) target = $region44
        $region43: #{tpu_custom_call.1} parent=31 // pred_region
          %197 = dma.done [#allocation6], 96
        $region44: #{tpu_custom_call.1} parent=31 // pred_fallthru
          _
        %s198 = sand.u32 %s29, 1
        %s199 = scalar_lea.sflag [#allocation3], %s198
        %s200 = sand.u32 %s29, 1
        %s201 = smul.addr %s200, 8
        %s202 = scalar_lea.vmem [#allocation2], %s201
        %p203 = pneg %p42
        %p204 = pneg %p39
        %p205 = pneg %p63
        %p206 = pneg %p60
        %p207 = pneg %p84
        %p208 = pneg %p81
        %p209 = pneg %p110
        %p210 = pneg %p107
        %s211 = sand.u32 %s97, 1
        %s212 = scalar_lea.sflag [#allocation4], %s211
        %s213 = sand.u32 %s97, 1
        %s214 = smul.addr %s213, 8
        %s215 = scalar_lea.vmem [#allocation8], %s214
        %v217 = vld [vmem:[%s185] sm:$0xff]
        %v218 = vlaneseq
        %v219 = vand.u32 %v218, 127
        %v220 = vadd.s32 %v219, 128
        %vm221 = vcmp.lt.s32.totalorder %v219, 0
        %v222 = vsub.s32 0, %v219
        %v223 = vsel %vm221, %v222, %v219
        %v224 = vshrl.u32 %v223, 4
        %v225 = vand.u32 %v223, 15
        %v226 = vsub.s32 0, %v225
        %v227 = vsel %vm221, %v226, %v225
        %vm228 = vcmp.lt.s32.totalorder %v220, 0
        %v229 = vsub.s32 0, %v220
        %v230 = vsel %vm228, %v229, %v220
        %v231 = vshrl.u32 %v230, 4
        %v232 = vand.u32 %v230, 15
        %v233 = vsub.s32 0, %v232
        %v234 = vsel %vm228, %v233, %v232
        %vm235 = vcmp.ne.s32.totalorder %v227, 0
        %vm236 = vcmp.ne.s32.totalorder %v234, 0
        %vm237 = vcmp.lt.s32.totalorder %v227, 0
        %vm238 = vcmp.lt.s32.totalorder %v234, 0
        %vm239 = vmand %vm237, %vm235
        %vm240 = vmand %vm238, %vm236
        %v241 = vadd.s32 %v227, 16
        %v242 = vadd.s32 %v234, 16
        %v243 = vsel %vm239, %v241, %v227
        %v244 = vsel %vm240, %v242, %v234
        %vm245 = vcmp.lt.s32.totalorder %v219, 16
        %vm246 = vcmp.lt.s32.totalorder %v220, 16
        %vm247 = vcmp.ge.s32.totalorder %v219, 240
        %vm248 = vcmp.ge.s32.totalorder %v220, 240
        %vm249 = vcmp.eq.s32.totalorder %v243, 0
        %vm250 = vcmp.eq.s32.totalorder %v244, 0
        %vm251 = vcmp.eq.s32.totalorder %v243, 15
        %vm252 = vcmp.eq.s32.totalorder %v244, 15
        %v254 = vcombine.high %v217, %v217
        %256 = vrot.lane.b32.xlu0 %v217, 16
        %v257 = vpop.permute.xlu0 %256
        %258 = vrot.lane.b32.xlu0 %v254, 16
        %v259 = vpop.permute.xlu0 %258
        %v260 = vsel %vm245, %v257, %v259
        %v261 = vsel %vm245, %v259, %v257
        %262 = vrot.lane.b32.xlu0 %v217, 112
        %v263 = vpop.permute.xlu0 %262
        %264 = vrot.lane.b32.xlu0 %v254, 112
        %v265 = vpop.permute.xlu0 %264
        %vm266 = vcmp.lt.s32.totalorder %v219, 112
        %v267 = vsel %vm266, %v263, %v265
        %v268 = vsel %vm266, %v265, %v263
        %v269 = vsel %vm245, 1, 0
        %v270 = vsel %vm246, 1, 0
        %vm271 = vcmp.eq.s32.totalorder %v269, 1
        %vm272 = vcmp.eq.s32.totalorder %v270, 1
        %v273 = vsel %vm271, %v267, %v261
        %v274 = vsel %vm272, %v268, %v260
        %v275 = vsel %vm247, 1, 0
        %v276 = vsel %vm248, 1, 0
        %vm277 = vcmp.eq.s32.totalorder %v275, 1
        %vm278 = vcmp.eq.s32.totalorder %v276, 1
        %v279 = vsel %vm277, %v261, %v267
        %v280 = vsel %vm278, %v260, %v268
        %281 = vrot.lane.b32.xlu0 %v273, 1
        %v282 = vpop.permute.xlu0 %281
        %283 = vrot.lane.b32.xlu0 %v274, 1
        %v284 = vpop.permute.xlu0 %283
        %vm285 = vcmp.lt.s32.totalorder %v219, 1
        %v286 = vsel %vm285, %v282, %v284
        %v287 = vsel %vm285, %v284, %v282
        %288 = vrot.lane.b32.xlu0 %v273, 127
        %v289 = vpop.permute.xlu0 %288
        %290 = vrot.lane.b32.xlu0 %v274, 127
        %v291 = vpop.permute.xlu0 %290
        %vm292 = vcmp.lt.s32.totalorder %v219, 127
        %v293 = vsel %vm292, %v289, %v291
        %v294 = vsel %vm292, %v291, %v289
        %v295 = vsel %vm249, 1, 0
        %v296 = vsel %vm250, 1, 0
        %vm297 = vcmp.eq.s32.totalorder %v295, 1
        %vm298 = vcmp.eq.s32.totalorder %v296, 1
        %v299 = vsel %vm297, %v293, %v287
        %v300 = vsel %vm298, %v294, %v286
        %v301 = vsel %vm251, 1, 0
        %v302 = vsel %vm252, 1, 0
        %vm303 = vcmp.eq.s32.totalorder %v301, 1
        %vm304 = vcmp.eq.s32.totalorder %v302, 1
        %v305 = vsel %vm303, %v287, %v293
        %v306 = vsel %vm304, %v286, %v294
        %v307 = vpack.c.bf16 %v299, %v299
        %v308 = vpack.c.bf16 %v300, %v300
        %v309 = vpack.c.bf16 %v273, %v273
        %v310 = vpack.c.bf16 %v274, %v274
        %v311 = vpack.c.bf16 %v305, %v305
        %v312 = vpack.c.bf16 %v306, %v306
        %v315 = vrot.slane %v309, 6
        %v316 = vrot.slane %v310, 6
        %v319 = vrot.slane %v311, 4
        %v320 = vrot.slane %v312, 4
        %vm321 = vcmask 1041408
        %v324 = vsel %vm321, %v307, %v315
        %v327 = vsel %vm321, %v308, %v316
        %vm328 = vcmask 1043456
        %v330 = vsel %vm328, %v324, %v319
        %v332 = vsel %vm328, %v327, %v320
        %v333 = vld [vmem:[#allocation5] sm:$0x3]
        %334 = vrot.lane.b32.xlu0 %v217, 1
        %v335 = vpop.permute.xlu0 %334
        %336 = vrot.lane.b32.xlu0 %v254, 1
        %v337 = vpop.permute.xlu0 %336
        %v338 = vsel %vm285, %v335, %v337
        %v339 = vsel %vm285, %v337, %v335
        %340 = vrot.lane.b32.xlu0 %v217, 127
        %v341 = vpop.permute.xlu0 %340
        %342 = vrot.lane.b32.xlu0 %v254, 127
        %v343 = vpop.permute.xlu0 %342
        %v344 = vsel %vm292, %v341, %v343
        %v345 = vsel %vm292, %v343, %v341
        %v346 = vsel %vm297, %v344, %v339
        %v347 = vsel %vm298, %v345, %v338
        %v348 = vsel %vm303, %v339, %v344
        %v349 = vsel %vm304, %v338, %v345
        %v350 = vpack.c.bf16 %v346, %v346
        %v351 = vpack.c.bf16 %v347, %v347
        %v352 = vpack.c.bf16 %v217, %v217
        %v353 = vpack.c.bf16 %v254, %v254
        %v354 = vpack.c.bf16 %v348, %v348
        %v355 = vpack.c.bf16 %v349, %v349
        %v358 = vrot.slane %v352, 6
        %v359 = vrot.slane %v353, 6
        %v362 = vrot.slane %v354, 4
        %v363 = vrot.slane %v355, 4
        %v366 = vsel %vm321, %v350, %v358
        %v369 = vsel %vm321, %v351, %v359
        %v371 = vsel %vm328, %v366, %v362
        %v373 = vsel %vm328, %v369, %v363
        %s374 = scalar_lea.vmem [#allocation5], 2
        %v375 = vld [vmem:[%s374] sm:$0x3]
        %vm376 = vcmask 97280
        %v378 = vsel %vm376, %v375, 0
        %vm380 = vcmask 1045504
        %v381 = vsel %vm380, %v371, 0
        %v383 = vsel %vm380, %v373, 0
        %385 = vmatprep.subr.bf16.mxu0 0
        %386 = vmatpush1.bf16.msra.mxu0 0
        %387 = vmatprep.subr.bf16.mxu0 0
        %388 = vmatpush1.bf16.msra.mxu0 0
        %389 = vmatprep.subr.bf16.mxu0 0
        %390 = vmatpush1.bf16.msra.mxu0 0
        %391 = vmatprep.subr.bf16.mxu0 0
        %392 = vmatpush1.bf16.msra.mxu0 0
        %393 = vmatprep.subr.bf16.mxu0 0
        %394 = vmatpush1.bf16.msra.mxu0 0
        %395 = vmatprep.subr.bf16.mxu0 0
        %396 = vmatpush1.bf16.msra.mxu0 0
        %397 = vmatprep.subr.bf16.mxu0 0
        %398 = vmatpush1.bf16.msra.mxu0 0
        %399 = vmatprep.subr.bf16.mxu0 %v383
        %400 = vmatpush1.bf16.msra.mxu0 %v381
        %401 = vmatprep.subr.bf16.mxu0 0
        %402 = vmatpush2.bf16.msra.mxu0 0
        %403 = vmatprep.subr.bf16.mxu0 0
        %404 = vmatpush2.bf16.msra.mxu0 0
        %405 = vmatprep.subr.bf16.mxu0 0
        %406 = vmatpush2.bf16.msra.mxu0 0
        %407 = vmatprep.subr.bf16.mxu0 0
        %408 = vmatpush2.bf16.msra.mxu0 0
        %409 = vmatprep.subr.bf16.mxu0 0
        %410 = vmatpush2.bf16.msra.mxu0 0
        %411 = vmatprep.subr.bf16.mxu0 0
        %412 = vmatpush2.bf16.msra.mxu0 0
        %413 = vmatprep.subr.bf16.mxu0 0
        %414 = vmatpush2.bf16.msra.mxu0 0
        %415 = vmatprep.subr.bf16.mxu0 0
        %416 = vmatpush2.bf16.msra.mxu0 0
        %417 = vmatprep.mubr.bf16.mxu0 0
        %418 = vmatmul.mubr.bf16.gmra.mxu0 %v378
        %v419 = vpop.f32.mrf.mxu0
        %v420 = vadd.f32 0.0, %v419
        %v421 = vpop.f32.mrf.mxu0
        %v422 = vadd.f32 0.0, %v421
        %v423 = vpop.f32.mrf.mxu0
        %v424 = vpop.f32.mrf.mxu0
        %425 = vdwg.mxu0
        %v427 = vsel %vm376, %v333, 0
        %v429 = vsel %vm380, %v330, 0
        %v431 = vsel %vm380, %v332, 0
        %433 = vmatprep.subr.bf16.mxu0 0
        %434 = vmatpush1.bf16.msra.mxu0 0
        %435 = vmatprep.subr.bf16.mxu0 0
        %436 = vmatpush1.bf16.msra.mxu0 0
        %437 = vmatprep.subr.bf16.mxu0 0
        %438 = vmatpush1.bf16.msra.mxu0 0
        %439 = vmatprep.subr.bf16.mxu0 0
        %440 = vmatpush1.bf16.msra.mxu0 0
        %441 = vmatprep.subr.bf16.mxu0 0
        %442 = vmatpush1.bf16.msra.mxu0 0
        %443 = vmatprep.subr.bf16.mxu0 0
        %444 = vmatpush1.bf16.msra.mxu0 0
        %445 = vmatprep.subr.bf16.mxu0 0
        %446 = vmatpush1.bf16.msra.mxu0 0
        %447 = vmatprep.subr.bf16.mxu0 %v431
        %448 = vmatpush1.bf16.msra.mxu0 %v429
        %449 = vmatprep.subr.bf16.mxu0 0
        %450 = vmatpush2.bf16.msra.mxu0 0
        %451 = vmatprep.subr.bf16.mxu0 0
        %452 = vmatpush2.bf16.msra.mxu0 0
        %453 = vmatprep.subr.bf16.mxu0 0
        %454 = vmatpush2.bf16.msra.mxu0 0
        %455 = vmatprep.subr.bf16.mxu0 0
        %456 = vmatpush2.bf16.msra.mxu0 0
        %457 = vmatprep.subr.bf16.mxu0 0
        %458 = vmatpush2.bf16.msra.mxu0 0
        %459 = vmatprep.subr.bf16.mxu0 0
        %460 = vmatpush2.bf16.msra.mxu0 0
        %461 = vmatprep.subr.bf16.mxu0 0
        %462 = vmatpush2.bf16.msra.mxu0 0
        %463 = vmatprep.subr.bf16.mxu0 0
        %464 = vmatpush2.bf16.msra.mxu0 0
        %465 = vmatprep.mubr.bf16.mxu0 0
        %466 = vmatmul.mubr.bf16.gmra.mxu0 %v427
        %v467 = vpop.f32.mrf.mxu0
        %v468 = vadd.f32 %v420, %v467
        %v469 = vpop.f32.mrf.mxu0
        %v470 = vadd.f32 %v422, %v469
        %v471 = vpop.f32.mrf.mxu0
        %v472 = vpop.f32.mrf.mxu0
        %473 = vdwg.mxu0
        %474 = vrot.lane.b32.xlu0 %v279, 1
        %v475 = vpop.permute.xlu0 %474
        %476 = vrot.lane.b32.xlu0 %v280, 1
        %v477 = vpop.permute.xlu0 %476
        %v478 = vsel %vm285, %v475, %v477
        %v479 = vsel %vm285, %v477, %v475
        %480 = vrot.lane.b32.xlu0 %v279, 127
        %v481 = vpop.permute.xlu0 %480
        %482 = vrot.lane.b32.xlu0 %v280, 127
        %v483 = vpop.permute.xlu0 %482
        %v484 = vsel %vm292, %v481, %v483
        %v485 = vsel %vm292, %v483, %v481
        %v486 = vsel %vm297, %v484, %v479
        %v487 = vsel %vm298, %v485, %v478
        %v488 = vsel %vm303, %v479, %v484
        %v489 = vsel %vm304, %v478, %v485
        %v490 = vpack.c.bf16 %v486, %v486
        %v491 = vpack.c.bf16 %v487, %v487
        %v492 = vpack.c.bf16 %v279, %v279
        %v493 = vpack.c.bf16 %v280, %v280
        %v494 = vpack.c.bf16 %v488, %v488
        %v495 = vpack.c.bf16 %v489, %v489
        %v498 = vrot.slane %v492, 6
        %v499 = vrot.slane %v493, 6
        %v502 = vrot.slane %v494, 4
        %v503 = vrot.slane %v495, 4
        %v506 = vsel %vm321, %v490, %v498
        %v509 = vsel %vm321, %v491, %v499
        %v511 = vsel %vm328, %v506, %v502
        %v513 = vsel %vm328, %v509, %v503
        %s514 = scalar_lea.vmem [#allocation5], 4
        %v515 = vld [vmem:[%s514] sm:$0x3]
        %v517 = vsel %vm376, %v515, 0
        %v519 = vsel %vm380, %v511, 0
        %v521 = vsel %vm380, %v513, 0
        %523 = vmatprep.subr.bf16.mxu0 0
        %524 = vmatpush1.bf16.msra.mxu0 0
        %525 = vmatprep.subr.bf16.mxu0 0
        %526 = vmatpush1.bf16.msra.mxu0 0
        %527 = vmatprep.subr.bf16.mxu0 0
        %528 = vmatpush1.bf16.msra.mxu0 0
        %529 = vmatprep.subr.bf16.mxu0 0
        %530 = vmatpush1.bf16.msra.mxu0 0
        %531 = vmatprep.subr.bf16.mxu0 0
        %532 = vmatpush1.bf16.msra.mxu0 0
        %533 = vmatprep.subr.bf16.mxu0 0
        %534 = vmatpush1.bf16.msra.mxu0 0
        %535 = vmatprep.subr.bf16.mxu0 0
        %536 = vmatpush1.bf16.msra.mxu0 0
        %537 = vmatprep.subr.bf16.mxu0 %v521
        %538 = vmatpush1.bf16.msra.mxu0 %v519
        %539 = vmatprep.subr.bf16.mxu0 0
        %540 = vmatpush2.bf16.msra.mxu0 0
        %541 = vmatprep.subr.bf16.mxu0 0
        %542 = vmatpush2.bf16.msra.mxu0 0
        %543 = vmatprep.subr.bf16.mxu0 0
        %544 = vmatpush2.bf16.msra.mxu0 0
        %545 = vmatprep.subr.bf16.mxu0 0
        %546 = vmatpush2.bf16.msra.mxu0 0
        %547 = vmatprep.subr.bf16.mxu0 0
        %548 = vmatpush2.bf16.msra.mxu0 0
        %549 = vmatprep.subr.bf16.mxu0 0
        %550 = vmatpush2.bf16.msra.mxu0 0
        %551 = vmatprep.subr.bf16.mxu0 0
        %552 = vmatpush2.bf16.msra.mxu0 0
        %553 = vmatprep.subr.bf16.mxu0 0
        %554 = vmatpush2.bf16.msra.mxu0 0
        %555 = vmatprep.mubr.bf16.mxu0 0
        %556 = vmatmul.mubr.bf16.gmra.mxu0 %v517
        %v557 = vpop.f32.mrf.mxu0
        %v558 = vadd.f32 0.0, %v557
        %v559 = vpop.f32.mrf.mxu0
        %v560 = vadd.f32 0.0, %v559
        %v561 = vpop.f32.mrf.mxu0
        %v562 = vpop.f32.mrf.mxu0
        %563 = vdwg.mxu0
        %v564 = vadd.f32 %v468, %v558
        %v565 = vadd.f32 %v470, %v560
        %v566 = vsel %vm328, %v564, 0.0
        %v567 = vsel %vm328, %v565, 0.0
        %v568 = vadd.f32 %v566, %v567
        %569 = vadd.xlane.f32.xlu0 %v568
        %v570 = vpop.xlane.xlu0 %569
        %v571 = vmul.f32 %v570, 0.00390625
        %v572 = vsub.f32 %v564, %v571
        %v573 = vsub.f32 %v565, %v571
        %v574 = vmul.f32 %v572, %v572
        %v575 = vmul.f32 %v573, %v573
        %v576 = vsel %vm328, %v574, 0.0
        %v577 = vsel %vm328, %v575, 0.0
        %v578 = vadd.f32 %v576, %v577
        %579 = vadd.xlane.f32.xlu0 %v578
        %v580 = vpop.xlane.xlu0 %579
        %v581 = vmul.f32 %v580, 0.00390625
        %v582 = vadd.f32 %v581, 1e-05
        %v583 = vrsqrt.pop %v582
        %v584 = vmul.f32 %v572, %v583
        %v585 = vmul.f32 %v573, %v583
        %586 = vrot.lane.b32.xlu0 %v584, 16
        %v587 = vpop.permute.xlu0 %586
        %588 = vrot.lane.b32.xlu0 %v585, 16
        %v589 = vpop.permute.xlu0 %588
        %v590 = vsel %vm245, %v587, %v589
        %v591 = vsel %vm245, %v589, %v587
        %592 = vrot.lane.b32.xlu0 %v584, 112
        %v593 = vpop.permute.xlu0 %592
        %594 = vrot.lane.b32.xlu0 %v585, 112
        %v595 = vpop.permute.xlu0 %594
        %v596 = vsel %vm266, %v593, %v595
        %v597 = vsel %vm266, %v595, %v593
        %v598 = vsel %vm271, %v596, %v591
        %v599 = vsel %vm272, %v597, %v590
        %v600 = vsel %vm277, %v591, %v596
        %v601 = vsel %vm278, %v590, %v597
        %602 = vrot.lane.b32.xlu0 %v598, 1
        %v603 = vpop.permute.xlu0 %602
        %604 = vrot.lane.b32.xlu0 %v599, 1
        %v605 = vpop.permute.xlu0 %604
        %v606 = vsel %vm285, %v603, %v605
        %v607 = vsel %vm285, %v605, %v603
        %608 = vrot.lane.b32.xlu0 %v598, 127
        %v609 = vpop.permute.xlu0 %608
        %610 = vrot.lane.b32.xlu0 %v599, 127
        %v611 = vpop.permute.xlu0 %610
        %v612 = vsel %vm292, %v609, %v611
        %v613 = vsel %vm292, %v611, %v609
        %v614 = vsel %vm297, %v612, %v607
        %v615 = vsel %vm298, %v613, %v606
        %v616 = vsel %vm303, %v607, %v612
        %v617 = vsel %vm304, %v606, %v613
        %v618 = vpack.c.bf16 %v614, %v614
        %v619 = vpack.c.bf16 %v615, %v615
        %v620 = vpack.c.bf16 %v598, %v598
        %v621 = vpack.c.bf16 %v599, %v599
        %v622 = vpack.c.bf16 %v616, %v616
        %v623 = vpack.c.bf16 %v617, %v617
        %v626 = vrot.slane %v620, 6
        %v627 = vrot.slane %v621, 6
        %v630 = vrot.slane %v622, 4
        %v631 = vrot.slane %v623, 4
        %v634 = vsel %vm321, %v618, %v626
        %v637 = vsel %vm321, %v619, %v627
        %v639 = vsel %vm328, %v634, %v630
        %v641 = vsel %vm328, %v637, %v631
        %v642 = vld [vmem:[#allocation7] sm:$0x3]
        %643 = vrot.lane.b32.xlu0 %v584, 1
        %v644 = vpop.permute.xlu0 %643
        %645 = vrot.lane.b32.xlu0 %v585, 1
        %v646 = vpop.permute.xlu0 %645
        %v647 = vsel %vm285, %v644, %v646
        %v648 = vsel %vm285, %v646, %v644
        %649 = vrot.lane.b32.xlu0 %v584, 127
        %v650 = vpop.permute.xlu0 %649
        %651 = vrot.lane.b32.xlu0 %v585, 127
        %v652 = vpop.permute.xlu0 %651
        %v653 = vsel %vm292, %v650, %v652
        %v654 = vsel %vm292, %v652, %v650
        %v655 = vsel %vm297, %v653, %v648
        %v656 = vsel %vm298, %v654, %v647
        %v657 = vsel %vm303, %v648, %v653
        %v658 = vsel %vm304, %v647, %v654
        %v659 = vpack.c.bf16 %v655, %v655
        %v660 = vpack.c.bf16 %v656, %v656
        %v661 = vpack.c.bf16 %v584, %v584
        %v662 = vpack.c.bf16 %v585, %v585
        %v663 = vpack.c.bf16 %v657, %v657
        %v664 = vpack.c.bf16 %v658, %v658
        %v667 = vrot.slane %v661, 6
        %v668 = vrot.slane %v662, 6
        %v671 = vrot.slane %v663, 4
        %v672 = vrot.slane %v664, 4
        %v675 = vsel %vm321, %v659, %v667
        %v678 = vsel %vm321, %v660, %v668
        %v680 = vsel %vm328, %v675, %v671
        %v682 = vsel %vm328, %v678, %v672
        %s683 = scalar_lea.vmem [#allocation7], 2
        %v684 = vld [vmem:[%s683] sm:$0x3]
        %v686 = vsel %vm376, %v684, 0
        %v688 = vsel %vm380, %v680, 0
        %v690 = vsel %vm380, %v682, 0
        %692 = vmatprep.subr.bf16.mxu0 0
        %693 = vmatpush1.bf16.msra.mxu0 0
        %694 = vmatprep.subr.bf16.mxu0 0
        %695 = vmatpush1.bf16.msra.mxu0 0
        %696 = vmatprep.subr.bf16.mxu0 0
        %697 = vmatpush1.bf16.msra.mxu0 0
        %698 = vmatprep.subr.bf16.mxu0 0
        %699 = vmatpush1.bf16.msra.mxu0 0
        %700 = vmatprep.subr.bf16.mxu0 0
        %701 = vmatpush1.bf16.msra.mxu0 0
        %702 = vmatprep.subr.bf16.mxu0 0
        %703 = vmatpush1.bf16.msra.mxu0 0
        %704 = vmatprep.subr.bf16.mxu0 0
        %705 = vmatpush1.bf16.msra.mxu0 0
        %706 = vmatprep.subr.bf16.mxu0 %v690
        %707 = vmatpush1.bf16.msra.mxu0 %v688
        %708 = vmatprep.subr.bf16.mxu0 0
        %709 = vmatpush2.bf16.msra.mxu0 0
        %710 = vmatprep.subr.bf16.mxu0 0
        %711 = vmatpush2.bf16.msra.mxu0 0
        %712 = vmatprep.subr.bf16.mxu0 0
        %713 = vmatpush2.bf16.msra.mxu0 0
        %714 = vmatprep.subr.bf16.mxu0 0
        %715 = vmatpush2.bf16.msra.mxu0 0
        %716 = vmatprep.subr.bf16.mxu0 0
        %717 = vmatpush2.bf16.msra.mxu0 0
        %718 = vmatprep.subr.bf16.mxu0 0
        %719 = vmatpush2.bf16.msra.mxu0 0
        %720 = vmatprep.subr.bf16.mxu0 0
        %721 = vmatpush2.bf16.msra.mxu0 0
        %722 = vmatprep.subr.bf16.mxu0 0
        %723 = vmatpush2.bf16.msra.mxu0 0
        %724 = vmatprep.mubr.bf16.mxu0 0
        %725 = vmatmul.mubr.bf16.gmra.mxu0 %v686
        %v726 = vpop.f32.mrf.mxu0
        %v727 = vadd.f32 0.0, %v726
        %v728 = vpop.f32.mrf.mxu0
        %v729 = vadd.f32 0.0, %v728
        %v730 = vpop.f32.mrf.mxu0
        %v731 = vpop.f32.mrf.mxu0
        %732 = vdwg.mxu0
        %v734 = vsel %vm376, %v642, 0
        %v736 = vsel %vm380, %v639, 0
        %v738 = vsel %vm380, %v641, 0
        %740 = vmatprep.subr.bf16.mxu0 0
        %741 = vmatpush1.bf16.msra.mxu0 0
        %742 = vmatprep.subr.bf16.mxu0 0
        %743 = vmatpush1.bf16.msra.mxu0 0
        %744 = vmatprep.subr.bf16.mxu0 0
        %745 = vmatpush1.bf16.msra.mxu0 0
        %746 = vmatprep.subr.bf16.mxu0 0
        %747 = vmatpush1.bf16.msra.mxu0 0
        %748 = vmatprep.subr.bf16.mxu0 0
        %749 = vmatpush1.bf16.msra.mxu0 0
        %750 = vmatprep.subr.bf16.mxu0 0
        %751 = vmatpush1.bf16.msra.mxu0 0
        %752 = vmatprep.subr.bf16.mxu0 0
        %753 = vmatpush1.bf16.msra.mxu0 0
        %754 = vmatprep.subr.bf16.mxu0 %v738
        %755 = vmatpush1.bf16.msra.mxu0 %v736
        %756 = vmatprep.subr.bf16.mxu0 0
        %757 = vmatpush2.bf16.msra.mxu0 0
        %758 = vmatprep.subr.bf16.mxu0 0
        %759 = vmatpush2.bf16.msra.mxu0 0
        %760 = vmatprep.subr.bf16.mxu0 0
        %761 = vmatpush2.bf16.msra.mxu0 0
        %762 = vmatprep.subr.bf16.mxu0 0
        %763 = vmatpush2.bf16.msra.mxu0 0
        %764 = vmatprep.subr.bf16.mxu0 0
        %765 = vmatpush2.bf16.msra.mxu0 0
        %766 = vmatprep.subr.bf16.mxu0 0
        %767 = vmatpush2.bf16.msra.mxu0 0
        %768 = vmatprep.subr.bf16.mxu0 0
        %769 = vmatpush2.bf16.msra.mxu0 0
        %770 = vmatprep.subr.bf16.mxu0 0
        %771 = vmatpush2.bf16.msra.mxu0 0
        %772 = vmatprep.mubr.bf16.mxu0 0
        %773 = vmatmul.mubr.bf16.gmra.mxu0 %v734
        %v774 = vpop.f32.mrf.mxu0
        %v775 = vadd.f32 %v727, %v774
        %v776 = vpop.f32.mrf.mxu0
        %v777 = vadd.f32 %v729, %v776
        %v778 = vpop.f32.mrf.mxu0
        %v779 = vpop.f32.mrf.mxu0
        %780 = vdwg.mxu0
        %781 = vrot.lane.b32.xlu0 %v600, 1
        %v782 = vpop.permute.xlu0 %781
        %783 = vrot.lane.b32.xlu0 %v601, 1
        %v784 = vpop.permute.xlu0 %783
        %v785 = vsel %vm285, %v782, %v784
        %v786 = vsel %vm285, %v784, %v782
        %787 = vrot.lane.b32.xlu0 %v600, 127
        %v788 = vpop.permute.xlu0 %787
        %789 = vrot.lane.b32.xlu0 %v601, 127
        %v790 = vpop.permute.xlu0 %789
        %v791 = vsel %vm292, %v788, %v790
        %v792 = vsel %vm292, %v790, %v788
        %v793 = vsel %vm297, %v791, %v786
        %v794 = vsel %vm298, %v792, %v785
        %v795 = vsel %vm303, %v786, %v791
        %v796 = vsel %vm304, %v785, %v792
        %v797 = vpack.c.bf16 %v793, %v793
        %v798 = vpack.c.bf16 %v794, %v794
        %v799 = vpack.c.bf16 %v600, %v600
        %v800 = vpack.c.bf16 %v601, %v601
        %v801 = vpack.c.bf16 %v795, %v795
        %v802 = vpack.c.bf16 %v796, %v796
        %v805 = vrot.slane %v799, 6
        %v806 = vrot.slane %v800, 6
        %v809 = vrot.slane %v801, 4
        %v810 = vrot.slane %v802, 4
        %v813 = vsel %vm321, %v797, %v805
        %v816 = vsel %vm321, %v798, %v806
        %v818 = vsel %vm328, %v813, %v809
        %v820 = vsel %vm328, %v816, %v810
        %s821 = scalar_lea.vmem [#allocation7], 4
        %v822 = vld [vmem:[%s821] sm:$0x3]
        %v824 = vsel %vm376, %v822, 0
        %v826 = vsel %vm380, %v818, 0
        %v828 = vsel %vm380, %v820, 0
        %830 = vmatprep.subr.bf16.mxu0 0
        %831 = vmatpush1.bf16.msra.mxu0 0
        %832 = vmatprep.subr.bf16.mxu0 0
        %833 = vmatpush1.bf16.msra.mxu0 0
        %834 = vmatprep.subr.bf16.mxu0 0
        %835 = vmatpush1.bf16.msra.mxu0 0
        %836 = vmatprep.subr.bf16.mxu0 0
        %837 = vmatpush1.bf16.msra.mxu0 0
        %838 = vmatprep.subr.bf16.mxu0 0
        %839 = vmatpush1.bf16.msra.mxu0 0
        %840 = vmatprep.subr.bf16.mxu0 0
        %841 = vmatpush1.bf16.msra.mxu0 0
        %842 = vmatprep.subr.bf16.mxu0 0
        %843 = vmatpush1.bf16.msra.mxu0 0
        %844 = vmatprep.subr.bf16.mxu0 %v828
        %845 = vmatpush1.bf16.msra.mxu0 %v826
        %846 = vmatprep.subr.bf16.mxu0 0
        %847 = vmatpush2.bf16.msra.mxu0 0
        %848 = vmatprep.subr.bf16.mxu0 0
        %849 = vmatpush2.bf16.msra.mxu0 0
        %850 = vmatprep.subr.bf16.mxu0 0
        %851 = vmatpush2.bf16.msra.mxu0 0
        %852 = vmatprep.subr.bf16.mxu0 0
        %853 = vmatpush2.bf16.msra.mxu0 0
        %854 = vmatprep.subr.bf16.mxu0 0
        %855 = vmatpush2.bf16.msra.mxu0 0
        %856 = vmatprep.subr.bf16.mxu0 0
        %857 = vmatpush2.bf16.msra.mxu0 0
        %858 = vmatprep.subr.bf16.mxu0 0
        %859 = vmatpush2.bf16.msra.mxu0 0
        %860 = vmatprep.subr.bf16.mxu0 0
        %861 = vmatpush2.bf16.msra.mxu0 0
        %862 = vmatprep.mubr.bf16.mxu0 0
        %863 = vmatmul.mubr.bf16.gmra.mxu0 %v824
        %v864 = vpop.f32.mrf.mxu0
        %v865 = vadd.f32 0.0, %v864
        %v866 = vpop.f32.mrf.mxu0
        %v867 = vadd.f32 0.0, %v866
        %v868 = vpop.f32.mrf.mxu0
        %v869 = vpop.f32.mrf.mxu0
        %870 = vdwg.mxu0
        %v871 = vadd.f32 %v775, %v865
        %v872 = vadd.f32 %v777, %v867
        %v873 = vsel %vm328, %v871, 0.0
        %v874 = vsel %vm328, %v872, 0.0
        %v875 = vadd.f32 %v873, %v874
        %876 = vadd.xlane.f32.xlu0 %v875
        %v877 = vpop.xlane.xlu0 %876
        %v878 = vmul.f32 %v877, 0.00390625
        %v879 = vsub.f32 %v871, %v878
        %v880 = vsub.f32 %v872, %v878
        %v881 = vmul.f32 %v879, %v879
        %v882 = vmul.f32 %v880, %v880
        %v883 = vsel %vm328, %v881, 0.0
        %v884 = vsel %vm328, %v882, 0.0
        %v885 = vadd.f32 %v883, %v884
        %886 = vadd.xlane.f32.xlu0 %v885
        %v887 = vpop.xlane.xlu0 %886
        %v888 = vmul.f32 %v887, 0.00390625
        %v889 = vadd.f32 %v888, 1e-05
        %v890 = vrsqrt.pop %v889
        %v891 = vmul.f32 %v879, %v890
        %v892 = vmul.f32 %v880, %v890
        %v893 = vmax.f32 %v891, 0.0
        %v894 = vmax.f32 %v892, 0.0
        %v897 = vcombine.low %v893, %v894
        %v899 = vadd.f32 %v217, %v897
        %900 = vst [vmem:[%s215] sm:$0xff] %v899
        %s901 = sand.u32 %s97, 1
        %s902 = scalar_lea.sflag [#allocation4], %s901
        %s903 = sand.u32 %s97, 1
        %s904 = smul.addr %s903, 8
        %s905 = scalar_lea.vmem [#allocation8], %s904
        // Predicated region
        $region45: #{tpu_custom_call.1} parent=31 // pred_check
          %p906 = pneg %p107
        $region46: #{tpu_custom_call.1} parent=31 // pred_check_branch
          %908 = sbr.rel (%p906) target = $region48
        $region47: #{tpu_custom_call.1} parent=31 // pred_region
          %s910 = ssub.s32 128, 128
          %911 = vsyncadd %s902, %s910
          %s912 = smul.addr %s21, 2
          %s913 = smul.addr %s912, 64
          %s914 = scalar_lea.hbm %s3, %s913
          %s916 = sshll.u32 %s905, 4
          %s917 = int_to_ptr.vmem [resolvable:$true] %s916
          %919 = dma.vmem_to_hbm [thread:$0]  %s917, 128, %s914, %s902
        $region48: #{tpu_custom_call.1} parent=31 // pred_fallthru
          _
      $region32: #{tpu_custom_call.1} parent=5 // pred_fallthru
        _
      %p920 = scmp.le.s32.totalorder 2, %s16
      // Predicated region
      $region49: #{tpu_custom_call.1} parent=5 // pred_check
        %p921 = pneg %p920
      $region50: #{tpu_custom_call.1} parent=5 // pred_check_branch
        %923 = sbr.rel (%p921) target = $region52
      $region51: #{tpu_custom_call.1} parent=5 // pred_region
        %s924 = ssub.s32 %s16, 2
        // Predicated region
        $region53: #{tpu_custom_call.1} parent=51 // pred_check
          %p925 = pneg %p113
        $region54: #{tpu_custom_call.1} parent=51 // pred_check_branch
          %927 = sbr.rel (%p925) target = $region56
        $region55: #{tpu_custom_call.1} parent=51 // pred_region
          %s928 = sand.u32 %s98, 1
          %s929 = scalar_lea.sflag [#allocation4], %s928
          %s930 = sand.u32 %s98, 1
          %s931 = smul.addr %s930, 8
          %s932 = scalar_lea.vmem [#allocation8], %s931
          %933 = dma.done %s929, 128
        $region56: #{tpu_custom_call.1} parent=51 // pred_fallthru
          _
      $region52: #{tpu_custom_call.1} parent=5 // pred_fallthru
        _
    $region6: #{tpu_custom_call.1} parent=1 // loop_footer
      %s20 = sadd.s32 1, %s16
    $region7: #{tpu_custom_call.1} parent=1 // loop_footer_branch
      %15 = sbr.rel target = $region3
    $region8: #{tpu_custom_call.1} parent=1 // loop_exit
      _
    %934 = vsyncpa [#allocation3], 1
    %s935 = scalar_lea.sflag [#allocation3], 1
    %936 = vsyncpa %s935, 1
    %937 = vsyncpa [#allocation6], 1
    %938 = vsyncpa [#allocation4], 1
    %s939 = scalar_lea.sflag [#allocation4], 1
    %940 = vsyncpa %s939, 1

// kernel: tpu_custom_call.1
$region0: #{tpu_custom_call.1}
  #allocation0 [shape = 'u32[]', space=smem, size = 0x4, offset = 0x4, fixed_abs, tag = 'smem constant byte address 0x4 - core index']
  #allocation1 [shape = 'u32[144,128]{1,0:T(1,128)}', space=vmem, size = 0x12000, scoped, tag = 'internal scratch']
  %s0 = inlined_call_operand.hbm [shape: f32[2,4,256], index: 0, kind: input, shape index: {}]
  %s1 = inlined_call_operand.hbm [shape: bf16[3,4,12], index: 1, kind: input, shape index: {}]
  %s2 = inlined_call_operand.hbm [shape: bf16[3,4,12], index: 2, kind: input, shape index: {}]
  %s3 = inlined_call_operand.hbm [shape: f32[2,4,256], index: 3, kind: output, shape index: {}]
  %s4 = sld [smem:[#allocation0]]
  $region57: #{tpu_custom_call.1} parent=0
    _
  %s6 = ssub.s32 1, %s4
  %s7 = scalar_select 0, %s6, %s4
  $region1: #{tpu_custom_call.1} parent=0
    #allocation2 [shape = 'u8[8192]{0}', space=vmem, size = 0x2000, scoped, tag = 'input window, operand 0']
    #allocation3 [shape = 's32[2]{0}', space=sflag, size = 0x8, scoped, tag = 'scoped memory for tpu_custom_call.1']
    #allocation4 [shape = 's32[2]{0}', space=sflag, size = 0x8, scoped, tag = 'scoped memory for tpu_custom_call.1']
    #allocation5 [shape = 'u8[3072]{0}', space=vmem, size = 0xc00, scoped, tag = 'input window, operand 1, single buffered']
    #allocation6 [shape = 's32[1]{0}', space=sflag, size = 0x4, scoped, tag = 'scoped memory for tpu_custom_call.1']
    #allocation7 [shape = 'u8[3072]{0}', space=vmem, size = 0xc00, scoped, tag = 'input window, operand 2, single buffered']
    #allocation8 [shape = 'u8[8192]{0}', space=vmem, size = 0x2000, scoped, tag = 'output window, operand 0']
    %8 = vsyncpa [#allocation3], 0
    %s9 = scalar_lea.sflag [#allocation3], 1
    %10 = vsyncpa %s9, 0
    %11 = vsyncpa [#allocation6], 0
    %12 = vsyncpa [#allocation4], 0
    %s13 = scalar_lea.sflag [#allocation4], 1
    %14 = vsyncpa %s13, 0
    loop: start=0, step=1, limit=4
    $region2: #{tpu_custom_call.1} parent=1 // loop_pre_header
      _
    $region3: #{tpu_custom_call.1} parent=1 // loop_header
      %s16 = sphi 0, %s20
      %p17 = scmp.ge.s32.totalorder %s16, 4
      %s26 = sphi 0, %s28
      %s29 = sphi 0, %s26
      %s30 = sphi 0, %s29
      %s46 = sphi 0, %s30
      %s50 = sphi 0, %s50
      %s52 = sphi 0, %s50
      %s53 = sphi 0, %s52
      %s67 = sphi 0, %s53
      %s71 = sphi 0, %s71
      %s73 = sphi 0, %s71
      %s74 = sphi 0, %s73
      %s88 = sphi 0, %s74
      %s94 = sphi 0, %s96
      %s97 = sphi 0, %s94
      %s98 = sphi 0, %s97
      %s114 = sphi 0, %s98
    $region4: #{tpu_custom_call.1} parent=1 // loop_header_branch
      %19 = sbr.rel (%p17) target = $region8
    $region5: #{tpu_custom_call.1} parent=1 // loop_body
      %s21 = ssub.s32 %s16, 1
      %s22 = ssub.s32 %s16, 2
      %s23 = sadd.s32 %s16, 1
      %s24 = ssub.s32 %s16, %s23
      %p25 = scmp.eq.s32.totalorder %s24, 0
      %s27 = sadd.s32 %s26, 1
      %s28 = scalar_select %p25, %s26, %s27
      %p31 = pneg %p25
      %p32 = scmp.eq.s32.totalorder %s16, 1
      %p33 = por %p31, %p32
      %p34 = scmp.ne.s32.totalorder %s26, %s29
      %p35 = scmp.eq.s32.totalorder %s16, 0
      %p36 = por %p34, %p35
      %p37 = scmp.ne.s32.totalorder %s26, %s29
      %p38 = scmp.eq.s32.totalorder %s21, 1
      %p39 = por %p37, %p38
      %p40 = scmp.ne.s32.totalorder %s29, %s30
      %p41 = scmp.eq.s32.totalorder %s21, 0
      %p42 = por %p40, %p41
      %p43 = scmp.ne.s32.totalorder %s29, %s30
      %p44 = scmp.eq.s32.totalorder %s22, 1
      %p45 = por %p43, %p44
      %p47 = scmp.ne.s32.totalorder %s30, %s46
      %p48 = scmp.eq.s32.totalorder %s22, 0
      %p49 = por %p47, %p48
      %s51 = sadd.s32 %s50, 1
      %p54 = scmp.eq.s32.totalorder %s16, 1
      %p55 = scmp.ne.s32.totalorder %s50, %s52
      %p56 = scmp.eq.s32.totalorder %s16, 0
      %p57 = por %p55, %p56
      %p58 = scmp.ne.s32.totalorder %s50, %s52
      %p59 = scmp.eq.s32.totalorder %s21, 1
      %p60 = por %p58, %p59
      %p61 = scmp.ne.s32.totalorder %s52, %s53
      %p62 = scmp.eq.s32.totalorder %s21, 0
      %p63 = por %p61, %p62
      %p64 = scmp.ne.s32.totalorder %s52, %s53
      %p65 = scmp.eq.s32.totalorder %s22, 1
      %p66 = por %p64, %p65
      %p68 = scmp.ne.s32.totalorder %s53, %s67
      %p69 = scmp.eq.s32.totalorder %s22, 0
      %p70 = por %p68, %p69
      %s72 = sadd.s32 %s71, 1
      %p75 = scmp.eq.s32.totalorder %s16, 1
      %p76 = scmp.ne.s32.totalorder %s71, %s73
      %p77 = scmp.eq.s32.totalorder %s16, 0
      %p78 = por %p76, %p77
      %p79 = scmp.ne.s32.totalorder %s71, %s73
      %p80 = scmp.eq.s32.totalorder %s21, 1
      %p81 = por %p79, %p80
      %p82 = scmp.ne.s32.totalorder %s73, %s74
      %p83 = scmp.eq.s32.totalorder %s21, 0
      %p84 = por %p82, %p83
      %p85 = scmp.ne.s32.totalorder %s73, %s74
      %p86 = scmp.eq.s32.totalorder %s22, 1
      %p87 = por %p85, %p86
      %p89 = scmp.ne.s32.totalorder %s74, %s88
      %p90 = scmp.eq.s32.totalorder %s22, 0
      %p91 = por %p89, %p90
      %s92 = ssub.s32 %s16, %s23
      %p93 = scmp.eq.s32.totalorder %s92, 0
      %s95 = sadd.s32 %s94, 1
      %s96 = scalar_select %p93, %s94, %s95
      %p99 = pneg %p93
      %p100 = scmp.eq.s32.totalorder %s16, 1
      %p101 = por %p99, %p100
      %p102 = scmp.ne.s32.totalorder %s94, %s97
      %p103 = scmp.eq.s32.totalorder %s16, 0
      %p104 = por %p102, %p103
      %p105 = scmp.ne.s32.totalorder %s94, %s97
      %p106 = scmp.eq.s32.totalorder %s21, 1
      %p107 = por %p105, %p106
      %p108 = scmp.ne.s32.totalorder %s97, %s98
      %p109 = scmp.eq.s32.totalorder %s21, 0
      %p110 = por %p108, %p109
      %p111 = scmp.ne.s32.totalorder %s97, %s98
      %p112 = scmp.eq.s32.totalorder %s22, 1
      %p113 = por %p111, %p112
      %p115 = scmp.ne.s32.totalorder %s98, %s114
      %p116 = scmp.eq.s32.totalorder %s22, 0
      %p117 = por %p115, %p116
      %p118 = scmp.le.s32.totalorder 1, %s16
      %p119 = scmp.lt.s32.totalorder %s16, 3
      %p120 = pnand %p118, %p119
      %p121 = pneg %p120
      // Predicated region
      $region9: #{tpu_custom_call.1} parent=5 // pred_check
        _
      $region10: #{tpu_custom_call.1} parent=5 // pred_check_branch
        %123 = sbr.rel (%p120) target = $region12
      $region11: #{tpu_custom_call.1} parent=5 // pred_region
        %s124 = ssub.s32 %s16, 1
        // Predicated region
        $region13: #{tpu_custom_call.1} parent=11 // pred_check
          %p125 = pneg %p63
        $region14: #{tpu_custom_call.1} parent=11 // pred_check_branch
          %127 = sbr.rel (%p125) target = $region16
        $region15: #{tpu_custom_call.1} parent=11 // pred_region
          %s129 = ssub.s32 96, 96
          %130 = vsyncadd [#allocation6], %s129
          %s131 = sshll.u32 [#allocation5], 4
          %s132 = int_to_ptr.vmem [resolvable:$true] %s131
          %137 = dma.hbm_to_vmem [thread:$0]  %s1, 96, %s132, [#allocation6], 32, 32, 2
        $region16: #{tpu_custom_call.1} parent=11 // pred_fallthru
          _
        // Predicated region
        $region17: #{tpu_custom_call.1} parent=11 // pred_check
          %p138 = pneg %p84
        $region18: #{tpu_custom_call.1} parent=11 // pred_check_branch
          %140 = sbr.rel (%p138) target = $region20
        $region19: #{tpu_custom_call.1} parent=11 // pred_region
          %s142 = ssub.s32 96, 96
          %143 = vsyncadd [#allocation6], %s142
          %s144 = sshll.u32 [#allocation7], 4
          %s145 = int_to_ptr.vmem [resolvable:$true] %s144
          %150 = dma.hbm_to_vmem [thread:$0]  %s2, 96, %s145, [#allocation6], 32, 32, 2
        $region20: #{tpu_custom_call.1} parent=11 // pred_fallthru
          _
      $region12: #{tpu_custom_call.1} parent=5 // pred_fallthru
        _
      %p151 = scmp.lt.s32.totalorder %s16, 2
      // Predicated region
      $region21: #{tpu_custom_call.1} parent=5 // pred_check
        %p152 = pneg %p151
      $region22: #{tpu_custom_call.1} parent=5 // pred_check_branch
        %154 = sbr.rel (%p152) target = $region24
      $region23: #{tpu_custom_call.1} parent=5 // pred_region
        // Predicated region
        $region25: #{tpu_custom_call.1} parent=23 // pred_check
          %p155 = pneg %p36
        $region26: #{tpu_custom_call.1} parent=23 // pred_check_branch
          %157 = sbr.rel (%p155) target = $region28
        $region27: #{tpu_custom_call.1} parent=23 // pred_region
          %s158 = sand.u32 %s26, 1
          %s159 = scalar_lea.sflag [#allocation3], %s158
          %s160 = sand.u32 %s26, 1
          %s161 = smul.addr %s160, 8
          %s162 = scalar_lea.vmem [#allocation2], %s161
          %s164 = ssub.s32 128, 128
          %165 = vsyncadd %s159, %s164
          %s166 = smul.addr %s16, 2
          %s167 = smul.addr %s166, 64
          %s168 = scalar_lea.hbm %s0, %s167
          %s170 = sshll.u32 %s162, 4
          %s171 = int_to_ptr.vmem [resolvable:$true] %s170
          %173 = dma.hbm_to_vmem [thread:$0]  %s168, 128, %s171, %s159
        $region28: #{tpu_custom_call.1} parent=23 // pred_fallthru
          _
      $region24: #{tpu_custom_call.1} parent=5 // pred_fallthru
        _
      %p174 = scmp.le.s32.totalorder 1, %s16
      %p175 = scmp.lt.s32.totalorder %s16, 3
      %p176 = pnand %p174, %p175
      %p177 = pneg %p176
      // Predicated region
      $region29: #{tpu_custom_call.1} parent=5 // pred_check
        _
      $region30: #{tpu_custom_call.1} parent=5 // pred_check_branch
        %179 = sbr.rel (%p176) target = $region32
      $region31: #{tpu_custom_call.1} parent=5 // pred_region
        %s180 = ssub.s32 %s16, 1
        %s181 = sand.u32 %s29, 1
        %s182 = scalar_lea.sflag [#allocation3], %s181
        %s183 = sand.u32 %s29, 1
        %s184 = smul.addr %s183, 8
        %s185 = scalar_lea.vmem [#allocation2], %s184
        // Predicated region
        $region33: #{tpu_custom_call.1} parent=31 // pred_check
          %p186 = pneg %p42
        $region34: #{tpu_custom_call.1} parent=31 // pred_check_branch
          %188 = sbr.rel (%p186) target = $region36
        $region35: #{tpu_custom_call.1} parent=31 // pred_region
          %189 = dma.done %s182, 128
        $region36: #{tpu_custom_call.1} parent=31 // pred_fallthru
          _
        // Predicated region
        $region37: #{tpu_custom_call.1} parent=31 // pred_check
          %p190 = pneg %p63
        $region38: #{tpu_custom_call.1} parent=31 // pred_check_branch
          %192 = sbr.rel (%p190) target = $region40
        $region39: #{tpu_custom_call.1} parent=31 // pred_region
          %193 = dma.done [#allocation6], 96
        $region40: #{tpu_custom_call.1} parent=31 // pred_fallthru
          _
        // Predicated region
        $region41: #{tpu_custom_call.1} parent=31 // pred_check
          %p194 = pneg %p84
        $region42: #{tpu_custom_call.1} parent=31 // pred_check_branch
          %196 = sbr.rel (%p194) target = $region44
        $region43: #{tpu_custom_call.1} parent=31 // pred_region
          %197 = dma.done [#allocation6], 96
        $region44: #{tpu_custom_call.1} parent=31 // pred_fallthru
          _
        %s198 = sand.u32 %s29, 1
        %s199 = scalar_lea.sflag [#allocation3], %s198
        %s200 = sand.u32 %s29, 1
        %s201 = smul.addr %s200, 8
        %s202 = scalar_lea.vmem [#allocation2], %s201
        %p203 = pneg %p42
        %p204 = pneg %p39
        %p205 = pneg %p63
        %p206 = pneg %p60
        %p207 = pneg %p84
        %p208 = pneg %p81
        %p209 = pneg %p110
        %p210 = pneg %p107
        %s211 = sand.u32 %s97, 1
        %s212 = scalar_lea.sflag [#allocation4], %s211
        %s213 = sand.u32 %s97, 1
        %s214 = smul.addr %s213, 8
        %s215 = scalar_lea.vmem [#allocation8], %s214
        %v217 = vld [vmem:[%s185] sm:$0xff]
        %v218 = vlaneseq
        %v219 = vand.u32 %v218, 127
        %v220 = vadd.s32 %v219, 128
        %vm221 = vcmp.lt.s32.totalorder %v219, 0
        %v222 = vsub.s32 0, %v219
        %v223 = vsel %vm221, %v222, %v219
        %v224 = vshrl.u32 %v223, 4
        %v225 = vand.u32 %v223, 15
        %v226 = vsub.s32 0, %v225
        %v227 = vsel %vm221, %v226, %v225
        %vm228 = vcmp.lt.s32.totalorder %v220, 0
        %v229 = vsub.s32 0, %v220
        %v230 = vsel %vm228, %v229, %v220
        %v231 = vshrl.u32 %v230, 4
        %v232 = vand.u32 %v230, 15
        %v233 = vsub.s32 0, %v232
        %v234 = vsel %vm228, %v233, %v232
        %vm235 = vcmp.ne.s32.totalorder %v227, 0
        %vm236 = vcmp.ne.s32.totalorder %v234, 0
        %vm237 = vcmp.lt.s32.totalorder %v227, 0
        %vm238 = vcmp.lt.s32.totalorder %v234, 0
        %vm239 = vmand %vm237, %vm235
        %vm240 = vmand %vm238, %vm236
        %v241 = vadd.s32 %v227, 16
        %v242 = vadd.s32 %v234, 16
        %v243 = vsel %vm239, %v241, %v227
        %v244 = vsel %vm240, %v242, %v234
        %vm245 = vcmp.lt.s32.totalorder %v219, 16
        %vm246 = vcmp.lt.s32.totalorder %v220, 16
        %vm247 = vcmp.ge.s32.totalorder %v219, 240
        %vm248 = vcmp.ge.s32.totalorder %v220, 240
        %vm249 = vcmp.eq.s32.totalorder %v243, 0
        %vm250 = vcmp.eq.s32.totalorder %v244, 0
        %vm251 = vcmp.eq.s32.totalorder %v243, 15
        %vm252 = vcmp.eq.s32.totalorder %v244, 15
        %v254 = vcombine.high %v217, %v217
        %256 = vrot.lane.b32.xlu0 %v217, 16
        %v257 = vpop.permute.xlu0 %256
        %258 = vrot.lane.b32.xlu0 %v254, 16
        %v259 = vpop.permute.xlu0 %258
        %v260 = vsel %vm245, %v257, %v259
        %v261 = vsel %vm245, %v259, %v257
        %262 = vrot.lane.b32.xlu0 %v217, 112
        %v263 = vpop.permute.xlu0 %262
        %264 = vrot.lane.b32.xlu0 %v254, 112
        %v265 = vpop.permute.xlu0 %264
        %vm266 = vcmp.lt.s32.totalorder %v219, 112
        %v267 = vsel %vm266, %v263, %v265
        %v268 = vsel %vm266, %v265, %v263
        %v269 = vsel %vm245, 1, 0
        %v270 = vsel %vm246, 1, 0
        %vm271 = vcmp.eq.s32.totalorder %v269, 1
        %vm272 = vcmp.eq.s32.totalorder %v270, 1
        %v273 = vsel %vm271, %v267, %v261
        %v274 = vsel %vm272, %v268, %v260
        %v275 = vsel %vm247, 1, 0
        %v276 = vsel %vm248, 1, 0
        %vm277 = vcmp.eq.s32.totalorder %v275, 1
        %vm278 = vcmp.eq.s32.totalorder %v276, 1
        %v279 = vsel %vm277, %v261, %v267
        %v280 = vsel %vm278, %v260, %v268
        %281 = vrot.lane.b32.xlu0 %v273, 1
        %v282 = vpop.permute.xlu0 %281
        %283 = vrot.lane.b32.xlu0 %v274, 1
        %v284 = vpop.permute.xlu0 %283
        %vm285 = vcmp.lt.s32.totalorder %v219, 1
        %v286 = vsel %vm285, %v282, %v284
        %v287 = vsel %vm285, %v284, %v282
        %288 = vrot.lane.b32.xlu0 %v273, 127
        %v289 = vpop.permute.xlu0 %288
        %290 = vrot.lane.b32.xlu0 %v274, 127
        %v291 = vpop.permute.xlu0 %290
        %vm292 = vcmp.lt.s32.totalorder %v219, 127
        %v293 = vsel %vm292, %v289, %v291
        %v294 = vsel %vm292, %v291, %v289
        %v295 = vsel %vm249, 1, 0
        %v296 = vsel %vm250, 1, 0
        %vm297 = vcmp.eq.s32.totalorder %v295, 1
        %vm298 = vcmp.eq.s32.totalorder %v296, 1
        %v299 = vsel %vm297, %v293, %v287
        %v300 = vsel %vm298, %v294, %v286
        %v301 = vsel %vm251, 1, 0
        %v302 = vsel %vm252, 1, 0
        %vm303 = vcmp.eq.s32.totalorder %v301, 1
        %vm304 = vcmp.eq.s32.totalorder %v302, 1
        %v305 = vsel %vm303, %v287, %v293
        %v306 = vsel %vm304, %v286, %v294
        %v307 = vpack.c.bf16 %v299, %v299
        %v308 = vpack.c.bf16 %v300, %v300
        %v309 = vpack.c.bf16 %v273, %v273
        %v310 = vpack.c.bf16 %v274, %v274
        %v311 = vpack.c.bf16 %v305, %v305
        %v312 = vpack.c.bf16 %v306, %v306
        %v315 = vrot.slane %v309, 6
        %v316 = vrot.slane %v310, 6
        %v319 = vrot.slane %v311, 4
        %v320 = vrot.slane %v312, 4
        %vm321 = vcmask 1041408
        %v324 = vsel %vm321, %v307, %v315
        %v327 = vsel %vm321, %v308, %v316
        %vm328 = vcmask 1043456
        %v330 = vsel %vm328, %v324, %v319
        %v332 = vsel %vm328, %v327, %v320
        %v333 = vld [vmem:[#allocation5] sm:$0x3]
        %334 = vrot.lane.b32.xlu0 %v217, 1
        %v335 = vpop.permute.xlu0 %334
        %336 = vrot.lane.b32.xlu0 %v254, 1
        %v337 = vpop.permute.xlu0 %336
        %v338 = vsel %vm285, %v335, %v337
        %v339 = vsel %vm285, %v337, %v335
        %340 = vrot.lane.b32.xlu0 %v217, 127
        %v341 = vpop.permute.xlu0 %340
        %342 = vrot.lane.b32.xlu0 %v254, 127
        %v343 = vpop.permute.xlu0 %342
        %v344 = vsel %vm292, %v341, %v343
        %v345 = vsel %vm292, %v343, %v341
        %v346 = vsel %vm297, %v344, %v339
        %v347 = vsel %vm298, %v345, %v338
        %v348 = vsel %vm303, %v339, %v344
        %v349 = vsel %vm304, %v338, %v345
        %v350 = vpack.c.bf16 %v346, %v346
        %v351 = vpack.c.bf16 %v347, %v347
        %v352 = vpack.c.bf16 %v217, %v217
        %v353 = vpack.c.bf16 %v254, %v254
        %v354 = vpack.c.bf16 %v348, %v348
        %v355 = vpack.c.bf16 %v349, %v349
        %v358 = vrot.slane %v352, 6
        %v359 = vrot.slane %v353, 6
        %v362 = vrot.slane %v354, 4
        %v363 = vrot.slane %v355, 4
        %v366 = vsel %vm321, %v350, %v358
        %v369 = vsel %vm321, %v351, %v359
        %v371 = vsel %vm328, %v366, %v362
        %v373 = vsel %vm328, %v369, %v363
        %s374 = scalar_lea.vmem [#allocation5], 2
        %v375 = vld [vmem:[%s374] sm:$0x3]
        %vm376 = vcmask 97280
        %v378 = vsel %vm376, %v375, 0
        %vm380 = vcmask 1045504
        %v381 = vsel %vm380, %v371, 0
        %v383 = vsel %vm380, %v373, 0
        %385 = vmatprep.subr.bf16.mxu0 0
        %386 = vmatpush1.bf16.msra.mxu0 0
        %387 = vmatprep.subr.bf16.mxu0 0
        %388 = vmatpush1.bf16.msra.mxu0 0
        %389 = vmatprep.subr.bf16.mxu0 0
        %390 = vmatpush1.bf16.msra.mxu0 0
        %391 = vmatprep.subr.bf16.mxu0 0
        %392 = vmatpush1.bf16.msra.mxu0 0
        %393 = vmatprep.subr.bf16.mxu0 0
        %394 = vmatpush1.bf16.msra.mxu0 0
        %395 = vmatprep.subr.bf16.mxu0 0
        %396 = vmatpush1.bf16.msra.mxu0 0
        %397 = vmatprep.subr.bf16.mxu0 0
        %398 = vmatpush1.bf16.msra.mxu0 0
        %399 = vmatprep.subr.bf16.mxu0 %v383
        %400 = vmatpush1.bf16.msra.mxu0 %v381
        %401 = vmatprep.subr.bf16.mxu0 0
        %402 = vmatpush2.bf16.msra.mxu0 0
        %403 = vmatprep.subr.bf16.mxu0 0
        %404 = vmatpush2.bf16.msra.mxu0 0
        %405 = vmatprep.subr.bf16.mxu0 0
        %406 = vmatpush2.bf16.msra.mxu0 0
        %407 = vmatprep.subr.bf16.mxu0 0
        %408 = vmatpush2.bf16.msra.mxu0 0
        %409 = vmatprep.subr.bf16.mxu0 0
        %410 = vmatpush2.bf16.msra.mxu0 0
        %411 = vmatprep.subr.bf16.mxu0 0
        %412 = vmatpush2.bf16.msra.mxu0 0
        %413 = vmatprep.subr.bf16.mxu0 0
        %414 = vmatpush2.bf16.msra.mxu0 0
        %415 = vmatprep.subr.bf16.mxu0 0
        %416 = vmatpush2.bf16.msra.mxu0 0
        %417 = vmatprep.mubr.bf16.mxu0 0
        %418 = vmatmul.mubr.bf16.gmra.mxu0 %v378
        %v419 = vpop.f32.mrf.mxu0
        %v420 = vadd.f32 0.0, %v419
        %v421 = vpop.f32.mrf.mxu0
        %v422 = vadd.f32 0.0, %v421
        %v423 = vpop.f32.mrf.mxu0
        %v424 = vpop.f32.mrf.mxu0
        %425 = vdwg.mxu0
        %v427 = vsel %vm376, %v333, 0
        %v429 = vsel %vm380, %v330, 0
        %v431 = vsel %vm380, %v332, 0
        %433 = vmatprep.subr.bf16.mxu0 0
        %434 = vmatpush1.bf16.msra.mxu0 0
        %435 = vmatprep.subr.bf16.mxu0 0
        %436 = vmatpush1.bf16.msra.mxu0 0
        %437 = vmatprep.subr.bf16.mxu0 0
        %438 = vmatpush1.bf16.msra.mxu0 0
        %439 = vmatprep.subr.bf16.mxu0 0
        %440 = vmatpush1.bf16.msra.mxu0 0
        %441 = vmatprep.subr.bf16.mxu0 0
        %442 = vmatpush1.bf16.msra.mxu0 0
        %443 = vmatprep.subr.bf16.mxu0 0
        %444 = vmatpush1.bf16.msra.mxu0 0
        %445 = vmatprep.subr.bf16.mxu0 0
        %446 = vmatpush1.bf16.msra.mxu0 0
        %447 = vmatprep.subr.bf16.mxu0 %v431
        %448 = vmatpush1.bf16.msra.mxu0 %v429
        %449 = vmatprep.subr.bf16.mxu0 0
        %450 = vmatpush2.bf16.msra.mxu0 0
        %451 = vmatprep.subr.bf16.mxu0 0
        %452 = vmatpush2.bf16.msra.mxu0 0
        %453 = vmatprep.subr.bf16.mxu0 0
        %454 = vmatpush2.bf16.msra.mxu0 0
        %455 = vmatprep.subr.bf16.mxu0 0
        %456 = vmatpush2.bf16.msra.mxu0 0
        %457 = vmatprep.subr.bf16.mxu0 0
        %458 = vmatpush2.bf16.msra.mxu0 0
        %459 = vmatprep.subr.bf16.mxu0 0
        %460 = vmatpush2.bf16.msra.mxu0 0
        %461 = vmatprep.subr.bf16.mxu0 0
        %462 = vmatpush2.bf16.msra.mxu0 0
        %463 = vmatprep.subr.bf16.mxu0 0
        %464 = vmatpush2.bf16.msra.mxu0 0
        %465 = vmatprep.mubr.bf16.mxu0 0
        %466 = vmatmul.mubr.bf16.gmra.mxu0 %v427
        %v467 = vpop.f32.mrf.mxu0
        %v468 = vadd.f32 %v420, %v467
        %v469 = vpop.f32.mrf.mxu0
        %v470 = vadd.f32 %v422, %v469
        %v471 = vpop.f32.mrf.mxu0
        %v472 = vpop.f32.mrf.mxu0
        %473 = vdwg.mxu0
        %474 = vrot.lane.b32.xlu0 %v279, 1
        %v475 = vpop.permute.xlu0 %474
        %476 = vrot.lane.b32.xlu0 %v280, 1
        %v477 = vpop.permute.xlu0 %476
        %v478 = vsel %vm285, %v475, %v477
        %v479 = vsel %vm285, %v477, %v475
        %480 = vrot.lane.b32.xlu0 %v279, 127
        %v481 = vpop.permute.xlu0 %480
        %482 = vrot.lane.b32.xlu0 %v280, 127
        %v483 = vpop.permute.xlu0 %482
        %v484 = vsel %vm292, %v481, %v483
        %v485 = vsel %vm292, %v483, %v481
        %v486 = vsel %vm297, %v484, %v479
        %v487 = vsel %vm298, %v485, %v478
        %v488 = vsel %vm303, %v479, %v484
        %v489 = vsel %vm304, %v478, %v485
        %v490 = vpack.c.bf16 %v486, %v486
        %v491 = vpack.c.bf16 %v487, %v487
        %v492 = vpack.c.bf16 %v279, %v279
        %v493 = vpack.c.bf16 %v280, %v280
        %v494 = vpack.c.bf16 %v488, %v488
        %v495 = vpack.c.bf16 %v489, %v489
        %v498 = vrot.slane %v492, 6
        %v499 = vrot.slane %v493, 6
        %v502 = vrot.slane %v494, 4
        %v503 = vrot.slane %v495, 4
        %v506 = vsel %vm321, %v490, %v498
        %v509 = vsel %vm321, %v491, %v499
        %v511 = vsel %vm328, %v506, %v502
        %v513 = vsel %vm328, %v509, %v503
        %s514 = scalar_lea.vmem [#allocation5], 4
        %v515 = vld [vmem:[%s514] sm:$0x3]
        %v517 = vsel %vm376, %v515, 0
        %v519 = vsel %vm380, %v511, 0
        %v521 = vsel %vm380, %v513, 0
        %523 = vmatprep.subr.bf16.mxu0 0
        %524 = vmatpush1.bf16.msra.mxu0 0
        %525 = vmatprep.subr.bf16.mxu0 0
        %526 = vmatpush1.bf16.msra.mxu0 0
        %527 = vmatprep.subr.bf16.mxu0 0
        %528 = vmatpush1.bf16.msra.mxu0 0
        %529 = vmatprep.subr.bf16.mxu0 0
        %530 = vmatpush1.bf16.msra.mxu0 0
        %531 = vmatprep.subr.bf16.mxu0 0
        %532 = vmatpush1.bf16.msra.mxu0 0
        %533 = vmatprep.subr.bf16.mxu0 0
        %534 = vmatpush1.bf16.msra.mxu0 0
        %535 = vmatprep.subr.bf16.mxu0 0
        %536 = vmatpush1.bf16.msra.mxu0 0
        %537 = vmatprep.subr.bf16.mxu0 %v521
        %538 = vmatpush1.bf16.msra.mxu0 %v519
        %539 = vmatprep.subr.bf16.mxu0 0
        %540 = vmatpush2.bf16.msra.mxu0 0
        %541 = vmatprep.subr.bf16.mxu0 0
        %542 = vmatpush2.bf16.msra.mxu0 0
        %543 = vmatprep.subr.bf16.mxu0 0
        %544 = vmatpush2.bf16.msra.mxu0 0
        %545 = vmatprep.subr.bf16.mxu0 0
        %546 = vmatpush2.bf16.msra.mxu0 0
        %547 = vmatprep.subr.bf16.mxu0 0
        %548 = vmatpush2.bf16.msra.mxu0 0
        %549 = vmatprep.subr.bf16.mxu0 0
        %550 = vmatpush2.bf16.msra.mxu0 0
        %551 = vmatprep.subr.bf16.mxu0 0
        %552 = vmatpush2.bf16.msra.mxu0 0
        %553 = vmatprep.subr.bf16.mxu0 0
        %554 = vmatpush2.bf16.msra.mxu0 0
        %555 = vmatprep.mubr.bf16.mxu0 0
        %556 = vmatmul.mubr.bf16.gmra.mxu0 %v517
        %v557 = vpop.f32.mrf.mxu0
        %v558 = vadd.f32 0.0, %v557
        %v559 = vpop.f32.mrf.mxu0
        %v560 = vadd.f32 0.0, %v559
        %v561 = vpop.f32.mrf.mxu0
        %v562 = vpop.f32.mrf.mxu0
        %563 = vdwg.mxu0
        %v564 = vadd.f32 %v468, %v558
        %v565 = vadd.f32 %v470, %v560
        %v566 = vsel %vm328, %v564, 0.0
        %v567 = vsel %vm328, %v565, 0.0
        %v568 = vadd.f32 %v566, %v567
        %569 = vadd.xlane.f32.xlu0 %v568
        %v570 = vpop.xlane.xlu0 %569
        %v571 = vmul.f32 %v570, 0.00390625
        %v572 = vsub.f32 %v564, %v571
        %v573 = vsub.f32 %v565, %v571
        %v574 = vmul.f32 %v572, %v572
        %v575 = vmul.f32 %v573, %v573
        %v576 = vsel %vm328, %v574, 0.0
        %v577 = vsel %vm328, %v575, 0.0
        %v578 = vadd.f32 %v576, %v577
        %579 = vadd.xlane.f32.xlu0 %v578
        %v580 = vpop.xlane.xlu0 %579
        %v581 = vmul.f32 %v580, 0.00390625
        %v582 = vadd.f32 %v581, 1e-05
        %v583 = vrsqrt.pop %v582
        %v584 = vmul.f32 %v572, %v583
        %v585 = vmul.f32 %v573, %v583
        %586 = vrot.lane.b32.xlu0 %v584, 16
        %v587 = vpop.permute.xlu0 %586
        %588 = vrot.lane.b32.xlu0 %v585, 16
        %v589 = vpop.permute.xlu0 %588
        %v590 = vsel %vm245, %v587, %v589
        %v591 = vsel %vm245, %v589, %v587
        %592 = vrot.lane.b32.xlu0 %v584, 112
        %v593 = vpop.permute.xlu0 %592
        %594 = vrot.lane.b32.xlu0 %v585, 112
        %v595 = vpop.permute.xlu0 %594
        %v596 = vsel %vm266, %v593, %v595
        %v597 = vsel %vm266, %v595, %v593
        %v598 = vsel %vm271, %v596, %v591
        %v599 = vsel %vm272, %v597, %v590
        %v600 = vsel %vm277, %v591, %v596
        %v601 = vsel %vm278, %v590, %v597
        %602 = vrot.lane.b32.xlu0 %v598, 1
        %v603 = vpop.permute.xlu0 %602
        %604 = vrot.lane.b32.xlu0 %v599, 1
        %v605 = vpop.permute.xlu0 %604
        %v606 = vsel %vm285, %v603, %v605
        %v607 = vsel %vm285, %v605, %v603
        %608 = vrot.lane.b32.xlu0 %v598, 127
        %v609 = vpop.permute.xlu0 %608
        %610 = vrot.lane.b32.xlu0 %v599, 127
        %v611 = vpop.permute.xlu0 %610
        %v612 = vsel %vm292, %v609, %v611
        %v613 = vsel %vm292, %v611, %v609
        %v614 = vsel %vm297, %v612, %v607
        %v615 = vsel %vm298, %v613, %v606
        %v616 = vsel %vm303, %v607, %v612
        %v617 = vsel %vm304, %v606, %v613
        %v618 = vpack.c.bf16 %v614, %v614
        %v619 = vpack.c.bf16 %v615, %v615
        %v620 = vpack.c.bf16 %v598, %v598
        %v621 = vpack.c.bf16 %v599, %v599
        %v622 = vpack.c.bf16 %v616, %v616
        %v623 = vpack.c.bf16 %v617, %v617
        %v626 = vrot.slane %v620, 6
        %v627 = vrot.slane %v621, 6
        %v630 = vrot.slane %v622, 4
        %v631 = vrot.slane %v623, 4
        %v634 = vsel %vm321, %v618, %v626
        %v637 = vsel %vm321, %v619, %v627
        %v639 = vsel %vm328, %v634, %v630
        %v641 = vsel %vm328, %v637, %v631
        %v642 = vld [vmem:[#allocation7] sm:$0x3]
        %643 = vrot.lane.b32.xlu0 %v584, 1
        %v644 = vpop.permute.xlu0 %643
        %645 = vrot.lane.b32.xlu0 %v585, 1
        %v646 = vpop.permute.xlu0 %645
        %v647 = vsel %vm285, %v644, %v646
        %v648 = vsel %vm285, %v646, %v644
        %649 = vrot.lane.b32.xlu0 %v584, 127
        %v650 = vpop.permute.xlu0 %649
        %651 = vrot.lane.b32.xlu0 %v585, 127
        %v652 = vpop.permute.xlu0 %651
        %v653 = vsel %vm292, %v650, %v652
        %v654 = vsel %vm292, %v652, %v650
        %v655 = vsel %vm297, %v653, %v648
        %v656 = vsel %vm298, %v654, %v647
        %v657 = vsel %vm303, %v648, %v653
        %v658 = vsel %vm304, %v647, %v654
        %v659 = vpack.c.bf16 %v655, %v655
        %v660 = vpack.c.bf16 %v656, %v656
        %v661 = vpack.c.bf16 %v584, %v584
        %v662 = vpack.c.bf16 %v585, %v585
        %v663 = vpack.c.bf16 %v657, %v657
        %v664 = vpack.c.bf16 %v658, %v658
        %v667 = vrot.slane %v661, 6
        %v668 = vrot.slane %v662, 6
        %v671 = vrot.slane %v663, 4
        %v672 = vrot.slane %v664, 4
        %v675 = vsel %vm321, %v659, %v667
        %v678 = vsel %vm321, %v660, %v668
        %v680 = vsel %vm328, %v675, %v671
        %v682 = vsel %vm328, %v678, %v672
        %s683 = scalar_lea.vmem [#allocation7], 2
        %v684 = vld [vmem:[%s683] sm:$0x3]
        %v686 = vsel %vm376, %v684, 0
        %v688 = vsel %vm380, %v680, 0
        %v690 = vsel %vm380, %v682, 0
        %692 = vmatprep.subr.bf16.mxu0 0
        %693 = vmatpush1.bf16.msra.mxu0 0
        %694 = vmatprep.subr.bf16.mxu0 0
        %695 = vmatpush1.bf16.msra.mxu0 0
        %696 = vmatprep.subr.bf16.mxu0 0
        %697 = vmatpush1.bf16.msra.mxu0 0
        %698 = vmatprep.subr.bf16.mxu0 0
        %699 = vmatpush1.bf16.msra.mxu0 0
        %700 = vmatprep.subr.bf16.mxu0 0
        %701 = vmatpush1.bf16.msra.mxu0 0
        %702 = vmatprep.subr.bf16.mxu0 0
        %703 = vmatpush1.bf16.msra.mxu0 0
        %704 = vmatprep.subr.bf16.mxu0 0
        %705 = vmatpush1.bf16.msra.mxu0 0
        %706 = vmatprep.subr.bf16.mxu0 %v690
        %707 = vmatpush1.bf16.msra.mxu0 %v688
        %708 = vmatprep.subr.bf16.mxu0 0
        %709 = vmatpush2.bf16.msra.mxu0 0
        %710 = vmatprep.subr.bf16.mxu0 0
        %711 = vmatpush2.bf16.msra.mxu0 0
        %712 = vmatprep.subr.bf16.mxu0 0
        %713 = vmatpush2.bf16.msra.mxu0 0
        %714 = vmatprep.subr.bf16.mxu0 0
        %715 = vmatpush2.bf16.msra.mxu0 0
        %716 = vmatprep.subr.bf16.mxu0 0
        %717 = vmatpush2.bf16.msra.mxu0 0
        %718 = vmatprep.subr.bf16.mxu0 0
        %719 = vmatpush2.bf16.msra.mxu0 0
        %720 = vmatprep.subr.bf16.mxu0 0
        %721 = vmatpush2.bf16.msra.mxu0 0
        %722 = vmatprep.subr.bf16.mxu0 0
        %723 = vmatpush2.bf16.msra.mxu0 0
        %724 = vmatprep.mubr.bf16.mxu0 0
        %725 = vmatmul.mubr.bf16.gmra.mxu0 %v686
        %v726 = vpop.f32.mrf.mxu0
        %v727 = vadd.f32 0.0, %v726
        %v728 = vpop.f32.mrf.mxu0
        %v729 = vadd.f32 0.0, %v728
        %v730 = vpop.f32.mrf.mxu0
        %v731 = vpop.f32.mrf.mxu0
        %732 = vdwg.mxu0
        %v734 = vsel %vm376, %v642, 0
        %v736 = vsel %vm380, %v639, 0
        %v738 = vsel %vm380, %v641, 0
        %740 = vmatprep.subr.bf16.mxu0 0
        %741 = vmatpush1.bf16.msra.mxu0 0
        %742 = vmatprep.subr.bf16.mxu0 0
        %743 = vmatpush1.bf16.msra.mxu0 0
        %744 = vmatprep.subr.bf16.mxu0 0
        %745 = vmatpush1.bf16.msra.mxu0 0
        %746 = vmatprep.subr.bf16.mxu0 0
        %747 = vmatpush1.bf16.msra.mxu0 0
        %748 = vmatprep.subr.bf16.mxu0 0
        %749 = vmatpush1.bf16.msra.mxu0 0
        %750 = vmatprep.subr.bf16.mxu0 0
        %751 = vmatpush1.bf16.msra.mxu0 0
        %752 = vmatprep.subr.bf16.mxu0 0
        %753 = vmatpush1.bf16.msra.mxu0 0
        %754 = vmatprep.subr.bf16.mxu0 %v738
        %755 = vmatpush1.bf16.msra.mxu0 %v736
        %756 = vmatprep.subr.bf16.mxu0 0
        %757 = vmatpush2.bf16.msra.mxu0 0
        %758 = vmatprep.subr.bf16.mxu0 0
        %759 = vmatpush2.bf16.msra.mxu0 0
        %760 = vmatprep.subr.bf16.mxu0 0
        %761 = vmatpush2.bf16.msra.mxu0 0
        %762 = vmatprep.subr.bf16.mxu0 0
        %763 = vmatpush2.bf16.msra.mxu0 0
        %764 = vmatprep.subr.bf16.mxu0 0
        %765 = vmatpush2.bf16.msra.mxu0 0
        %766 = vmatprep.subr.bf16.mxu0 0
        %767 = vmatpush2.bf16.msra.mxu0 0
        %768 = vmatprep.subr.bf16.mxu0 0
        %769 = vmatpush2.bf16.msra.mxu0 0
        %770 = vmatprep.subr.bf16.mxu0 0
        %771 = vmatpush2.bf16.msra.mxu0 0
        %772 = vmatprep.mubr.bf16.mxu0 0
        %773 = vmatmul.mubr.bf16.gmra.mxu0 %v734
        %v774 = vpop.f32.mrf.mxu0
        %v775 = vadd.f32 %v727, %v774
        %v776 = vpop.f32.mrf.mxu0
        %v777 = vadd.f32 %v729, %v776
        %v778 = vpop.f32.mrf.mxu0
        %v779 = vpop.f32.mrf.mxu0
        %780 = vdwg.mxu0
        %781 = vrot.lane.b32.xlu0 %v600, 1
        %v782 = vpop.permute.xlu0 %781
        %783 = vrot.lane.b32.xlu0 %v601, 1
        %v784 = vpop.permute.xlu0 %783
        %v785 = vsel %vm285, %v782, %v784
        %v786 = vsel %vm285, %v784, %v782
        %787 = vrot.lane.b32.xlu0 %v600, 127
        %v788 = vpop.permute.xlu0 %787
        %789 = vrot.lane.b32.xlu0 %v601, 127
        %v790 = vpop.permute.xlu0 %789
        %v791 = vsel %vm292, %v788, %v790
        %v792 = vsel %vm292, %v790, %v788
        %v793 = vsel %vm297, %v791, %v786
        %v794 = vsel %vm298, %v792, %v785
        %v795 = vsel %vm303, %v786, %v791
        %v796 = vsel %vm304, %v785, %v792
        %v797 = vpack.c.bf16 %v793, %v793
        %v798 = vpack.c.bf16 %v794, %v794
        %v799 = vpack.c.bf16 %v600, %v600
        %v800 = vpack.c.bf16 %v601, %v601
        %v801 = vpack.c.bf16 %v795, %v795
        %v802 = vpack.c.bf16 %v796, %v796
        %v805 = vrot.slane %v799, 6
        %v806 = vrot.slane %v800, 6
        %v809 = vrot.slane %v801, 4
        %v810 = vrot.slane %v802, 4
        %v813 = vsel %vm321, %v797, %v805
        %v816 = vsel %vm321, %v798, %v806
        %v818 = vsel %vm328, %v813, %v809
        %v820 = vsel %vm328, %v816, %v810
        %s821 = scalar_lea.vmem [#allocation7], 4
        %v822 = vld [vmem:[%s821] sm:$0x3]
        %v824 = vsel %vm376, %v822, 0
        %v826 = vsel %vm380, %v818, 0
        %v828 = vsel %vm380, %v820, 0
        %830 = vmatprep.subr.bf16.mxu0 0
        %831 = vmatpush1.bf16.msra.mxu0 0
        %832 = vmatprep.subr.bf16.mxu0 0
        %833 = vmatpush1.bf16.msra.mxu0 0
        %834 = vmatprep.subr.bf16.mxu0 0
        %835 = vmatpush1.bf16.msra.mxu0 0
        %836 = vmatprep.subr.bf16.mxu0 0
        %837 = vmatpush1.bf16.msra.mxu0 0
        %838 = vmatprep.subr.bf16.mxu0 0
        %839 = vmatpush1.bf16.msra.mxu0 0
        %840 = vmatprep.subr.bf16.mxu0 0
        %841 = vmatpush1.bf16.msra.mxu0 0
        %842 = vmatprep.subr.bf16.mxu0 0
        %843 = vmatpush1.bf16.msra.mxu0 0
        %844 = vmatprep.subr.bf16.mxu0 %v828
        %845 = vmatpush1.bf16.msra.mxu0 %v826
        %846 = vmatprep.subr.bf16.mxu0 0
        %847 = vmatpush2.bf16.msra.mxu0 0
        %848 = vmatprep.subr.bf16.mxu0 0
        %849 = vmatpush2.bf16.msra.mxu0 0
        %850 = vmatprep.subr.bf16.mxu0 0
        %851 = vmatpush2.bf16.msra.mxu0 0
        %852 = vmatprep.subr.bf16.mxu0 0
        %853 = vmatpush2.bf16.msra.mxu0 0
        %854 = vmatprep.subr.bf16.mxu0 0
        %855 = vmatpush2.bf16.msra.mxu0 0
        %856 = vmatprep.subr.bf16.mxu0 0
        %857 = vmatpush2.bf16.msra.mxu0 0
        %858 = vmatprep.subr.bf16.mxu0 0
        %859 = vmatpush2.bf16.msra.mxu0 0
        %860 = vmatprep.subr.bf16.mxu0 0
        %861 = vmatpush2.bf16.msra.mxu0 0
        %862 = vmatprep.mubr.bf16.mxu0 0
        %863 = vmatmul.mubr.bf16.gmra.mxu0 %v824
        %v864 = vpop.f32.mrf.mxu0
        %v865 = vadd.f32 0.0, %v864
        %v866 = vpop.f32.mrf.mxu0
        %v867 = vadd.f32 0.0, %v866
        %v868 = vpop.f32.mrf.mxu0
        %v869 = vpop.f32.mrf.mxu0
        %870 = vdwg.mxu0
        %v871 = vadd.f32 %v775, %v865
        %v872 = vadd.f32 %v777, %v867
        %v873 = vsel %vm328, %v871, 0.0
        %v874 = vsel %vm328, %v872, 0.0
        %v875 = vadd.f32 %v873, %v874
        %876 = vadd.xlane.f32.xlu0 %v875
        %v877 = vpop.xlane.xlu0 %876
        %v878 = vmul.f32 %v877, 0.00390625
        %v879 = vsub.f32 %v871, %v878
        %v880 = vsub.f32 %v872, %v878
        %v881 = vmul.f32 %v879, %v879
        %v882 = vmul.f32 %v880, %v880
        %v883 = vsel %vm328, %v881, 0.0
        %v884 = vsel %vm328, %v882, 0.0
        %v885 = vadd.f32 %v883, %v884
        %886 = vadd.xlane.f32.xlu0 %v885
        %v887 = vpop.xlane.xlu0 %886
        %v888 = vmul.f32 %v887, 0.00390625
        %v889 = vadd.f32 %v888, 1e-05
        %v890 = vrsqrt.pop %v889
        %v891 = vmul.f32 %v879, %v890
        %v892 = vmul.f32 %v880, %v890
        %v893 = vmax.f32 %v891, 0.0
        %v894 = vmax.f32 %v892, 0.0
        %v897 = vcombine.low %v893, %v894
        %v899 = vadd.f32 %v217, %v897
        %900 = vst [vmem:[%s215] sm:$0xff] %v899
        %s901 = sand.u32 %s97, 1
        %s902 = scalar_lea.sflag [#allocation4], %s901
        %s903 = sand.u32 %s97, 1
        %s904 = smul.addr %s903, 8
        %s905 = scalar_lea.vmem [#allocation8], %s904
        // Predicated region
        $region45: #{tpu_custom_call.1} parent=31 // pred_check
          %p906 = pneg %p107
        $region46: #{tpu_custom_call.1} parent=31 // pred_check_branch
          %908 = sbr.rel (%p906) target = $region48
        $region47: #{tpu_custom_call.1} parent=31 // pred_region
          %s910 = ssub.s32 128, 128
          %911 = vsyncadd %s902, %s910
          %s912 = smul.addr %s21, 2
          %s913 = smul.addr %s912, 64
          %s914 = scalar_lea.hbm %s3, %s913
          %s916 = sshll.u32 %s905, 4
          %s917 = int_to_ptr.vmem [resolvable:$true] %s916
          %919 = dma.vmem_to_hbm [thread:$0]  %s917, 128, %s914, %s902
        $region48: #{tpu_custom_call.1} parent=31 // pred_fallthru
          _
      $region32: #{tpu_custom_call.1} parent=5 // pred_fallthru
        _
      %p920 = scmp.le.s32.totalorder 2, %s16
      // Predicated region
      $region49: #{tpu_custom_call.1} parent=5 // pred_check
        %p921 = pneg %p920
      $region50: #{tpu_custom_call.1} parent=5 // pred_check_branch
        %923 = sbr.rel (%p921) target = $region52
      $region51: #{tpu_custom_call.1} parent=5 // pred_region
        %s924 = ssub.s32 %s16, 2
        // Predicated region
        $region53: #{tpu_custom_call.1} parent=51 // pred_check
          %p925 = pneg %p113
        $region54: #{tpu_custom_call.1} parent=51 // pred_check_branch
          %927 = sbr.rel (%p925) target = $region56
        $region55: #{tpu_custom_call.1} parent=51 // pred_region
          %s928 = sand.u32 %s98, 1
          %s929 = scalar_lea.sflag [#allocation4], %s928
          %s930 = sand.u32 %s98, 1
          %s931 = smul.addr %s930, 8
          %s932 = scalar_lea.vmem [#allocation8], %s931
          %933 = dma.done %s929, 128
        $region56: #{tpu_custom_call.1} parent=51 // pred_fallthru
          _
      $region52: #{tpu_custom_call.1} parent=5 // pred_fallthru
        _
    $region6: #{tpu_custom_call.1} parent=1 // loop_footer
      %s20 = sadd.s32 1, %s16
    $region7: #{tpu_custom_call.1} parent=1 // loop_footer_branch
      %15 = sbr.rel target = $region3
    $region8: #{tpu_custom_call.1} parent=1 // loop_exit
      _
    %934 = vsyncpa [#allocation3], 1
    %s935 = scalar_lea.sflag [#allocation3], 1
    %936 = vsyncpa %s935, 1
    %937 = vsyncpa [#allocation6], 1
    %938 = vsyncpa [#allocation4], 1
    %s939 = scalar_lea.sflag [#allocation4], 1
    %940 = vsyncpa %s939, 1

</llo_original>
